<compile_context>
chip_gen: v5e
topology: v5e:2x2
jax: 0.10.0
libtpu: 0.0.40
codegen_flags: <defaults>
</compile_context>

<pallas_src>
import jax
import jax.numpy as jnp
from jax import lax
from jax.experimental import pallas as pl
from jax.experimental.pallas import tpu as pltpu

HIDDEN = 4096          # fixed by nn.Linear(input_dim, 4096)
HIDDEN_TILE = 512      # only used by the large-shape fallback path
VMEM_BUDGET = 28 << 20  # conservative single-step gate (v7x scoped default ~32 MiB)


def _log_softmax_rows(logits):
    m = jnp.max(logits, axis=1, keepdims=True)
    shifted = logits - m
    lse = jnp.log(jnp.sum(jnp.exp(shifted), axis=1, keepdims=True))
    return shifted - lse


def _fused_kernel(x_ref, w1_ref, b1_ref, w2_ref, b2_ref, o_ref):
    """Single grid step per batch tile: everything resident in VMEM."""
    h = jnp.dot(x_ref[...], w1_ref[...], preferred_element_type=jnp.float32)
    h = jnp.maximum(h + b1_ref[...], 0.0)
    logits = jnp.dot(h, w2_ref[...], preferred_element_type=jnp.float32) + b2_ref[...]
    o_ref[...] = _log_softmax_rows(logits).astype(o_ref.dtype)


def _tiled_kernel(x_ref, w1t_ref, b1_ref, w2_ref, b2_ref, o_ref):
    """Fallback: k-tiled over HIDDEN; w1 tile is a contiguous (th, D) slab."""
    k = pl.program_id(1)

    @pl.when(k == 0)
    def _init():
        o_ref[...] = jnp.zeros_like(o_ref)

    # h = relu(x @ w1[:, k_tile] + b1[k_tile]); w1 stored transposed (HIDDEN, D).
    h = lax.dot_general(
        x_ref[...], w1t_ref[...],
        dimension_numbers=(((1,), (1,)), ((), ())),
        preferred_element_type=jnp.float32)
    h = jnp.maximum(h + b1_ref[...], 0.0)

    # Accumulate partial logits directly into the resident f32 output block.
    o_ref[...] += jnp.dot(h, w2_ref[...], preferred_element_type=jnp.float32)

    @pl.when(k == pl.num_programs(1) - 1)
    def _finalize():
        o_ref[...] = _log_softmax_rows(o_ref[...] + b2_ref[...])


def _pick_batch_tile(B):
    """Largest multiple of 8 that divides B and is <= 128; whole B otherwise."""
    for tb in range(min(B, 128), 7, -1):
        if tb % 8 == 0 and B % tb == 0:
            return tb
    return B  # tiny / ragged batch: single full-extent block


def _single_step_fits(tb, D, C):
    # Conservative: count every streamed input + output double-buffered, f32.
    bytes_needed = 4 * 2 * (tb * D + D * HIDDEN + HIDDEN + HIDDEN * C + C + tb * C)
    return bytes_needed <= VMEM_BUDGET


def linear_logsoftmax1(x, w1, b1, w2, b2):
    """x: (B, D) f32; w1: (D, 4096); b1: (1, 4096); w2: (4096, C); b2: (1, C)."""
    B, D = x.shape
    C = w2.shape[1]
    assert w1.shape == (D, HIDDEN) and b1.shape == (1, HIDDEN)
    assert w2.shape == (HIDDEN, C) and b2.shape == (1, C)

    tb = _pick_batch_tile(B)

    if _single_step_fits(tb, D, C):
        # ---- fast path: no reduction grid axis at all -----------------------
        grid_spec = pltpu.PrefetchScalarGridSpec(
            num_scalar_prefetch=0,
            grid=(B // tb,),
            in_specs=[
                pl.BlockSpec((tb, D), lambda b: (b, 0)),        # x batch tile
                pl.BlockSpec((D, HIDDEN), lambda b: (0, 0)),    # w1 (whole)
                pl.BlockSpec((1, HIDDEN), lambda b: (0, 0)),    # b1
                pl.BlockSpec((HIDDEN, C), lambda b: (0, 0)),    # w2 (whole)
                pl.BlockSpec((1, C), lambda b: (0, 0)),         # b2
            ],
            out_specs=pl.BlockSpec((tb, C), lambda b: (b, 0)),
        )
        return pl.pallas_call(
            _fused_kernel,
            out_shape=jax.ShapeDtypeStruct((B, C), jnp.float32),
            grid_spec=grid_spec,
            compiler_params=pltpu.CompilerParams(
                dimension_semantics=("parallel",),
            ),
        )(x, w1, b1, w2, b2)

    # ---- fallback path: large D/C, stream HIDDEN in contiguous tiles --------
    th = HIDDEN_TILE
    assert HIDDEN % th == 0
    w1_t = jnp.transpose(w1)   # (HIDDEN, D): each k-tile is one contiguous slab

    grid_spec = pltpu.PrefetchScalarGridSpec(
        num_scalar_prefetch=0,
        grid=(B // tb, HIDDEN // th),
        in_specs=[
            pl.BlockSpec((tb, D), lambda b, k: (b, 0)),   # x: reused every k
            pl.BlockSpec((th, D), lambda b, k: (k, 0)),   # w1^T contiguous tile
            pl.BlockSpec((1, th), lambda b, k: (0, k)),   # b1 slice
            pl.BlockSpec((th, C), lambda b, k: (k, 0)),   # w2 row tile
            pl.BlockSpec((1, C), lambda b, k: (0, 0)),    # b2 (tiny, resident)
        ],
        out_specs=pl.BlockSpec((tb, C), lambda b, k: (b, 0)),
    )
    return pl.pallas_call(
        _tiled_kernel,
        out_shape=jax.ShapeDtypeStruct((B, C), jnp.float32),
        grid_spec=grid_spec,
        compiler_params=pltpu.CompilerParams(
            dimension_semantics=("parallel", "arbitrary"),
            vmem_limit_bytes=40 << 20,  # within v7x's 64 MiB physical VMEM
        ),
    )(x, w1_t, b1, w2, b2)


def reference(x, w1, b1, w2, b2):
    h = jnp.maximum(x @ w1 + b1, 0.0)
    logits = h @ w2 + b2
    return jax.nn.log_softmax(logits, axis=1)


if __name__ == "__main__":
    # Small, deterministic shapes consistent with the module's forward:
    # batch=8, input_dim=32, nclass=16 (hidden fixed at 4096).
    batch, input_dim, nclass = 8, 32, 16

    key = jax.random.PRNGKey(0)
    k_x, k_w1, k_b1, k_w2, k_b2 = jax.random.split(key, 5)

    x = jax.random.normal(k_x, (batch, input_dim), dtype=jnp.float32)

    # Deterministic init (uniform, Linear-style scaling); stored as (in, out).
    bound1 = 1.0 / (input_dim ** 0.5)
    w1 = jax.random.uniform(k_w1, (input_dim, HIDDEN), jnp.float32, -bound1, bound1)
    b1 = jax.random.uniform(k_b1, (1, HIDDEN), jnp.float32, -bound1, bound1)

    bound2 = 1.0 / (HIDDEN ** 0.5)
    w2 = jax.random.uniform(k_w2, (HIDDEN, nclass), jnp.float32, -bound2, bound2)
    b2 = jax.random.uniform(k_b2, (1, nclass), jnp.float32, -bound2, bound2)

    out = linear_logsoftmax1(x, w1, b1, w2, b2)
    out = jax.block_until_ready(out)

    ref = reference(x, w1, b1, w2, b2)
    assert out.shape == (batch, nclass)
    assert jnp.allclose(out, ref, atol=1e-4, rtol=1e-4), "mismatch vs reference"

    print("KERNEL_OK")
</pallas_src>

<mosaic_0001>
module attributes {stable_mosaic.version = 11 : i64} {
  func.func @_fused_kernel(%arg0: i32, %arg1: memref<8x32xf32, #tpu.memory_space<vmem>>, %arg2: memref<32x4096xf32, #tpu.memory_space<vmem>>, %arg3: memref<1x4096xf32, #tpu.memory_space<vmem>>, %arg4: memref<4096x16xf32, #tpu.memory_space<vmem>>, %arg5: memref<1x16xf32, #tpu.memory_space<vmem>>, %arg6: memref<8x16xf32, #tpu.memory_space<vmem>>) attributes {dimension_semantics = [#tpu.dimension_semantics<parallel>], iteration_bounds = array<i64: 1>, scalar_prefetch = 0 : i64, scratch_operands = 0 : i64, tpu.core_type = #tpu.core_type<tc>, window_params = [{transform_indices = @transform_0, window_bounds = array<i64: 8, 32>}, {pipeline_mode = #tpu.pipeline_mode<synchronous>, transform_indices = @transform_1, window_bounds = array<i64: 32, 4096>}, {pipeline_mode = #tpu.pipeline_mode<synchronous>, transform_indices = @transform_2, window_bounds = array<i64: 1, 4096>}, {pipeline_mode = #tpu.pipeline_mode<synchronous>, transform_indices = @transform_3, window_bounds = array<i64: 4096, 16>}, {pipeline_mode = #tpu.pipeline_mode<synchronous>, transform_indices = @transform_4, window_bounds = array<i64: 1, 16>}, {transform_indices = @transform_5, window_bounds = array<i64: 8, 16>}]} {
    %c0 = arith.constant 0 : index
    %c0_0 = arith.constant 0 : index
    %0 = vector.load %arg1[%c0, %c0_0] : memref<8x32xf32, #tpu.memory_space<vmem>>, vector<8x32xf32>
    %c0_1 = arith.constant 0 : index
    %c0_2 = arith.constant 0 : index
    %1 = vector.load %arg2[%c0_1, %c0_2] : memref<32x4096xf32, #tpu.memory_space<vmem>>, vector<32x4096xf32>
    %cst = arith.constant dense<0.000000e+00> : vector<8x4096xf32>
    %2 = tpu.matmul %0, %1, %cst {dimension_numbers = #tpu.dot_dimension_numbers<[1], [0], [0], [1], [0, 0, 1, 1], [], []>} : vector<8x32xf32>, vector<32x4096xf32>, vector<8x4096xf32> -> vector<8x4096xf32>
    %c0_3 = arith.constant 0 : index
    %c0_4 = arith.constant 0 : index
    %3 = vector.load %arg3[%c0_3, %c0_4] : memref<1x4096xf32, #tpu.memory_space<vmem>>, vector<1x4096xf32>
    %4 = vector.broadcast %3 : vector<1x4096xf32> to vector<8x4096xf32>
    %5 = arith.addf %2, %4 : vector<8x4096xf32>
    %cst_5 = arith.constant 0.000000e+00 : f32
    %6 = vector.broadcast %cst_5 : f32 to vector<8x4096xf32>
    %7 = arith.maximumf %5, %6 : vector<8x4096xf32>
    %c0_6 = arith.constant 0 : index
    %c0_7 = arith.constant 0 : index
    %8 = vector.load %arg4[%c0_6, %c0_7] : memref<4096x16xf32, #tpu.memory_space<vmem>>, vector<4096x16xf32>
    %cst_8 = arith.constant dense<0.000000e+00> : vector<8x16xf32>
    %9 = tpu.matmul %7, %8, %cst_8 {dimension_numbers = #tpu.dot_dimension_numbers<[1], [0], [0], [1], [0, 0, 1, 1], [], []>} : vector<8x4096xf32>, vector<4096x16xf32>, vector<8x16xf32> -> vector<8x16xf32>
    %c0_9 = arith.constant 0 : index
    %c0_10 = arith.constant 0 : index
    %10 = vector.load %arg5[%c0_9, %c0_10] : memref<1x16xf32, #tpu.memory_space<vmem>>, vector<1x16xf32>
    %11 = vector.broadcast %10 : vector<1x16xf32> to vector<8x16xf32>
    %12 = arith.addf %9, %11 : vector<8x16xf32>
    %cst_11 = arith.constant dense<0xFF800000> : vector<8xf32>
    %13 = vector.multi_reduction <maximumf>, %12, %cst_11 [1] : vector<8x16xf32> to vector<8xf32>
    %14 = vector.shape_cast %13 : vector<8xf32> to vector<8x1xf32>
    %15 = vector.broadcast %14 : vector<8x1xf32> to vector<8x16xf32>
    %16 = arith.subf %12, %15 : vector<8x16xf32>
    %17 = math.exp %16 : vector<8x16xf32>
    %cst_12 = arith.constant dense<0.000000e+00> : vector<8xf32>
    %18 = vector.multi_reduction <add>, %17, %cst_12 [1] : vector<8x16xf32> to vector<8xf32>
    %19 = vector.shape_cast %18 : vector<8xf32> to vector<8x1xf32>
    %20 = math.log %19 : vector<8x1xf32>
    %21 = vector.broadcast %20 : vector<8x1xf32> to vector<8x16xf32>
    %22 = arith.subf %16, %21 : vector<8x16xf32>
    %c0_13 = arith.constant 0 : index
    %c0_14 = arith.constant 0 : index
    %23 = vector.load %arg6[%c0_13, %c0_14] : memref<8x16xf32, #tpu.memory_space<vmem>>, vector<8x16xf32>
    tpu.vector_store %arg6[%c0_13, %c0_14], %22 {strides = array<i32>} : memref<8x16xf32, #tpu.memory_space<vmem>>, vector<8x16xf32>,
    return
  }
  func.func @transform_0(%arg0: i32) -> (i32, i32) {
    %c0_i32 = arith.constant 0 : i32
    %c0_i32_0 = arith.constant 0 : i32
    return %arg0, %c0_i32 : i32, i32
  }
  func.func @transform_1(%arg0: i32) -> (i32, i32) {
    %c0_i32 = arith.constant 0 : i32
    %c0_i32_0 = arith.constant 0 : i32
    %c0_i32_1 = arith.constant 0 : i32
    return %c0_i32, %c0_i32_0 : i32, i32
  }
  func.func @transform_2(%arg0: i32) -> (i32, i32) {
    %c0_i32 = arith.constant 0 : i32
    %c0_i32_0 = arith.constant 0 : i32
    %c0_i32_1 = arith.constant 0 : i32
    return %c0_i32, %c0_i32_0 : i32, i32
  }
  func.func @transform_3(%arg0: i32) -> (i32, i32) {
    %c0_i32 = arith.constant 0 : i32
    %c0_i32_0 = arith.constant 0 : i32
    %c0_i32_1 = arith.constant 0 : i32
    return %c0_i32, %c0_i32_0 : i32, i32
  }
  func.func @transform_4(%arg0: i32) -> (i32, i32) {
    %c0_i32 = arith.constant 0 : i32
    %c0_i32_0 = arith.constant 0 : i32
    %c0_i32_1 = arith.constant 0 : i32
    return %c0_i32, %c0_i32_0 : i32, i32
  }
  func.func @transform_5(%arg0: i32) -> (i32, i32) {
    %c0_i32 = arith.constant 0 : i32
    %c0_i32_0 = arith.constant 0 : i32
    return %arg0, %c0_i32 : i32, i32
  }
}

</mosaic_0001>

<llo_original>
// kernel: tpu_custom_call.1
$region0: #{tpu_custom_call.1}
  #allocation0 [shape = 'u32[]', space=smem, size = 0x4, offset = 0x4, fixed_abs, tag = 'smem constant byte address 0x4 - core index']
  #allocation1 [shape = 'u32[72,128]{1,0:T(1,128)}', space=vmem, size = 0x9000, scoped, tag = 'internal scratch']
  %s0 = inlined_call_operand.vmem [shape: f32[8,32], index: 0, kind: input, shape index: {}]
  %s1 = inlined_call_operand.vmem [shape: f32[32,4096], index: 1, kind: input, shape index: {}]
  %s2 = inlined_call_operand.vmem [shape: f32[1,4096], index: 2, kind: input, shape index: {}]
  %s3 = inlined_call_operand.vmem [shape: f32[4096,16], index: 3, kind: input, shape index: {}]
  %s4 = inlined_call_operand.vmem [shape: f32[1,16], index: 4, kind: input, shape index: {}]
  %s5 = inlined_call_operand.hbm [shape: f32[8,16], index: 5, kind: output, shape index: {}]
  %s6 = sld [smem:[#allocation0]]
  $region30: #{tpu_custom_call.1} parent=0
    _
  %s8 = ssub.s32 1, %s6
  %s9 = scalar_select 0, %s8, %s6
  $region1: #{tpu_custom_call.1} parent=0
    #allocation2 [shape = 'u8[4096]{0}', space=vmem, size = 0x1000, scoped, tag = 'output window, operand 0, single buffered']
    #allocation3 [shape = 's32[1]{0}', space=sflag, size = 0x4, scoped, tag = 'scoped memory for tpu_custom_call.1']
    %10 = vsyncpa [#allocation3], 0
    // Predicated region
    $region2: #{tpu_custom_call.1} parent=1 // pred_check
      _
    $region3: #{tpu_custom_call.1} parent=1 // pred_check_branch
      %12 = sbr.rel (0) target = $region5
    $region4: #{tpu_custom_call.1} parent=1 // pred_region
      _
    $region5: #{tpu_custom_call.1} parent=1 // pred_fallthru
      _
    // Predicated region
    $region6: #{tpu_custom_call.1} parent=1 // pred_check
      _
    $region7: #{tpu_custom_call.1} parent=1 // pred_check_branch
      %14 = sbr.rel (0) target = $region9
    $region8: #{tpu_custom_call.1} parent=1 // pred_region
      _
    $region9: #{tpu_custom_call.1} parent=1 // pred_fallthru
      _
    // Predicated region
    $region10: #{tpu_custom_call.1} parent=1 // pred_check
      _
    $region11: #{tpu_custom_call.1} parent=1 // pred_check_branch
      %16 = sbr.rel (0) target = $region13
    $region12: #{tpu_custom_call.1} parent=1 // pred_region
      _
    $region13: #{tpu_custom_call.1} parent=1 // pred_fallthru
      _
    // Predicated region
    $region14: #{tpu_custom_call.1} parent=1 // pred_check
      _
    $region15: #{tpu_custom_call.1} parent=1 // pred_check_branch
      %18 = sbr.rel (0) target = $region17
    $region16: #{tpu_custom_call.1} parent=1 // pred_region
      _
    $region17: #{tpu_custom_call.1} parent=1 // pred_fallthru
      _
    // Predicated region
    $region18: #{tpu_custom_call.1} parent=1 // pred_check
      _
    $region19: #{tpu_custom_call.1} parent=1 // pred_check_branch
      %20 = sbr.rel (0) target = $region21
    $region20: #{tpu_custom_call.1} parent=1 // pred_region
      _
    $region21: #{tpu_custom_call.1} parent=1 // pred_fallthru
      _
    %v21 = vld [vmem:[%s0] sm:$0xff]
    %v22 = vld [vmem:[%s1] sm:$0xff]
    %v23 = vld [vmem:[%s1 + $0x8] sm:$0xff]
    %v24 = vld [vmem:[%s1 + $0x10] sm:$0xff]
    %v25 = vld [vmem:[%s1 + $0x18] sm:$0xff]
    %v26 = vld [vmem:[%s1 + $0x20] sm:$0xff]
    %v27 = vld [vmem:[%s1 + $0x28] sm:$0xff]
    %v28 = vld [vmem:[%s1 + $0x30] sm:$0xff]
    %v29 = vld [vmem:[%s1 + $0x38] sm:$0xff]
    %v30 = vld [vmem:[%s1 + $0x40] sm:$0xff]
    %v31 = vld [vmem:[%s1 + $0x48] sm:$0xff]
    %v32 = vld [vmem:[%s1 + $0x50] sm:$0xff]
    %v33 = vld [vmem:[%s1 + $0x58] sm:$0xff]
    %v34 = vld [vmem:[%s1 + $0x60] sm:$0xff]
    %v35 = vld [vmem:[%s1 + $0x68] sm:$0xff]
    %v36 = vld [vmem:[%s1 + $0x70] sm:$0xff]
    %v37 = vld [vmem:[%s1 + $0x78] sm:$0xff]
    %v38 = vld [vmem:[%s1 + $0x80] sm:$0xff]
    %v39 = vld [vmem:[%s1 + $0x88] sm:$0xff]
    %v40 = vld [vmem:[%s1 + $0x90] sm:$0xff]
    %v41 = vld [vmem:[%s1 + $0x98] sm:$0xff]
    %v42 = vld [vmem:[%s1 + $0xa0] sm:$0xff]
    %v43 = vld [vmem:[%s1 + $0xa8] sm:$0xff]
    %v44 = vld [vmem:[%s1 + $0xb0] sm:$0xff]
    %v45 = vld [vmem:[%s1 + $0xb8] sm:$0xff]
    %v46 = vld [vmem:[%s1 + $0xc0] sm:$0xff]
    %v47 = vld [vmem:[%s1 + $0xc8] sm:$0xff]
    %v48 = vld [vmem:[%s1 + $0xd0] sm:$0xff]
    %v49 = vld [vmem:[%s1 + $0xd8] sm:$0xff]
    %v50 = vld [vmem:[%s1 + $0xe0] sm:$0xff]
    %v51 = vld [vmem:[%s1 + $0xe8] sm:$0xff]
    %v52 = vld [vmem:[%s1 + $0xf0] sm:$0xff]
    %v53 = vld [vmem:[%s1 + $0xf8] sm:$0xff]
    %v54 = vld [vmem:[%s1 + $0x100] sm:$0xff]
    %v55 = vld [vmem:[%s1 + $0x108] sm:$0xff]
    %v56 = vld [vmem:[%s1 + $0x110] sm:$0xff]
    %v57 = vld [vmem:[%s1 + $0x118] sm:$0xff]
    %v58 = vld [vmem:[%s1 + $0x120] sm:$0xff]
    %v59 = vld [vmem:[%s1 + $0x128] sm:$0xff]
    %v60 = vld [vmem:[%s1 + $0x130] sm:$0xff]
    %v61 = vld [vmem:[%s1 + $0x138] sm:$0xff]
    %v62 = vld [vmem:[%s1 + $0x140] sm:$0xff]
    %v63 = vld [vmem:[%s1 + $0x148] sm:$0xff]
    %v64 = vld [vmem:[%s1 + $0x150] sm:$0xff]
    %v65 = vld [vmem:[%s1 + $0x158] sm:$0xff]
    %v66 = vld [vmem:[%s1 + $0x160] sm:$0xff]
    %v67 = vld [vmem:[%s1 + $0x168] sm:$0xff]
    %v68 = vld [vmem:[%s1 + $0x170] sm:$0xff]
    %v69 = vld [vmem:[%s1 + $0x178] sm:$0xff]
    %v70 = vld [vmem:[%s1 + $0x180] sm:$0xff]
    %v71 = vld [vmem:[%s1 + $0x188] sm:$0xff]
    %v72 = vld [vmem:[%s1 + $0x190] sm:$0xff]
    %v73 = vld [vmem:[%s1 + $0x198] sm:$0xff]
    %v74 = vld [vmem:[%s1 + $0x1a0] sm:$0xff]
    %v75 = vld [vmem:[%s1 + $0x1a8] sm:$0xff]
    %v76 = vld [vmem:[%s1 + $0x1b0] sm:$0xff]
    %v77 = vld [vmem:[%s1 + $0x1b8] sm:$0xff]
    %v78 = vld [vmem:[%s1 + $0x1c0] sm:$0xff]
    %v79 = vld [vmem:[%s1 + $0x1c8] sm:$0xff]
    %v80 = vld [vmem:[%s1 + $0x1d0] sm:$0xff]
    %v81 = vld [vmem:[%s1 + $0x1d8] sm:$0xff]
    %v82 = vld [vmem:[%s1 + $0x1e0] sm:$0xff]
    %v83 = vld [vmem:[%s1 + $0x1e8] sm:$0xff]
    %v84 = vld [vmem:[%s1 + $0x1f0] sm:$0xff]
    %v85 = vld [vmem:[%s1 + $0x1f8] sm:$0xff]
    %v86 = vld [vmem:[%s1 + $0x200] sm:$0xff]
    %v87 = vld [vmem:[%s1 + $0x208] sm:$0xff]
    %v88 = vld [vmem:[%s1 + $0x210] sm:$0xff]
    %v89 = vld [vmem:[%s1 + $0x218] sm:$0xff]
    %v90 = vld [vmem:[%s1 + $0x220] sm:$0xff]
    %v91 = vld [vmem:[%s1 + $0x228] sm:$0xff]
    %v92 = vld [vmem:[%s1 + $0x230] sm:$0xff]
    %v93 = vld [vmem:[%s1 + $0x238] sm:$0xff]
    %v94 = vld [vmem:[%s1 + $0x240] sm:$0xff]
    %v95 = vld [vmem:[%s1 + $0x248] sm:$0xff]
    %v96 = vld [vmem:[%s1 + $0x250] sm:$0xff]
    %v97 = vld [vmem:[%s1 + $0x258] sm:$0xff]
    %v98 = vld [vmem:[%s1 + $0x260] sm:$0xff]
    %v99 = vld [vmem:[%s1 + $0x268] sm:$0xff]
    %v100 = vld [vmem:[%s1 + $0x270] sm:$0xff]
    %v101 = vld [vmem:[%s1 + $0x278] sm:$0xff]
    %v102 = vld [vmem:[%s1 + $0x280] sm:$0xff]
    %v103 = vld [vmem:[%s1 + $0x288] sm:$0xff]
    %v104 = vld [vmem:[%s1 + $0x290] sm:$0xff]
    %v105 = vld [vmem:[%s1 + $0x298] sm:$0xff]
    %v106 = vld [vmem:[%s1 + $0x2a0] sm:$0xff]
    %v107 = vld [vmem:[%s1 + $0x2a8] sm:$0xff]
    %v108 = vld [vmem:[%s1 + $0x2b0] sm:$0xff]
    %v109 = vld [vmem:[%s1 + $0x2b8] sm:$0xff]
    %v110 = vld [vmem:[%s1 + $0x2c0] sm:$0xff]
    %v111 = vld [vmem:[%s1 + $0x2c8] sm:$0xff]
    %v112 = vld [vmem:[%s1 + $0x2d0] sm:$0xff]
    %v113 = vld [vmem:[%s1 + $0x2d8] sm:$0xff]
    %v114 = vld [vmem:[%s1 + $0x2e0] sm:$0xff]
    %v115 = vld [vmem:[%s1 + $0x2e8] sm:$0xff]
    %v116 = vld [vmem:[%s1 + $0x2f0] sm:$0xff]
    %v117 = vld [vmem:[%s1 + $0x2f8] sm:$0xff]
    %v118 = vld [vmem:[%s1 + $0x300] sm:$0xff]
    %v119 = vld [vmem:[%s1 + $0x308] sm:$0xff]
    %v120 = vld [vmem:[%s1 + $0x310] sm:$0xff]
    %v121 = vld [vmem:[%s1 + $0x318] sm:$0xff]
    %v122 = vld [vmem:[%s1 + $0x320] sm:$0xff]
    %v123 = vld [vmem:[%s1 + $0x328] sm:$0xff]
    %v124 = vld [vmem:[%s1 + $0x330] sm:$0xff]
    %v125 = vld [vmem:[%s1 + $0x338] sm:$0xff]
    %v126 = vld [vmem:[%s1 + $0x340] sm:$0xff]
    %v127 = vld [vmem:[%s1 + $0x348] sm:$0xff]
    %v128 = vld [vmem:[%s1 + $0x350] sm:$0xff]
    %v129 = vld [vmem:[%s1 + $0x358] sm:$0xff]
    %v130 = vld [vmem:[%s1 + $0x360] sm:$0xff]
    %v131 = vld [vmem:[%s1 + $0x368] sm:$0xff]
    %v132 = vld [vmem:[%s1 + $0x370] sm:$0xff]
    %v133 = vld [vmem:[%s1 + $0x378] sm:$0xff]
    %v134 = vld [vmem:[%s1 + $0x380] sm:$0xff]
    %v135 = vld [vmem:[%s1 + $0x388] sm:$0xff]
    %v136 = vld [vmem:[%s1 + $0x390] sm:$0xff]
    %v137 = vld [vmem:[%s1 + $0x398] sm:$0xff]
    %v138 = vld [vmem:[%s1 + $0x3a0] sm:$0xff]
    %v139 = vld [vmem:[%s1 + $0x3a8] sm:$0xff]
    %v140 = vld [vmem:[%s1 + $0x3b0] sm:$0xff]
    %v141 = vld [vmem:[%s1 + $0x3b8] sm:$0xff]
    %v142 = vld [vmem:[%s1 + $0x3c0] sm:$0xff]
    %v143 = vld [vmem:[%s1 + $0x3c8] sm:$0xff]
    %v144 = vld [vmem:[%s1 + $0x3d0] sm:$0xff]
    %v145 = vld [vmem:[%s1 + $0x3d8] sm:$0xff]
    %v146 = vld [vmem:[%s1 + $0x3e0] sm:$0xff]
    %v147 = vld [vmem:[%s1 + $0x3e8] sm:$0xff]
    %v148 = vld [vmem:[%s1 + $0x3f0] sm:$0xff]
    %v149 = vld [vmem:[%s1 + $0x3f8] sm:$0xff]
    %v150 = vld [vmem:[%s2] sm:$0xff]
    %v151 = vld [vmem:[%s2 + $0x8] sm:$0xff]
    %v152 = vld [vmem:[%s2 + $0x10] sm:$0xff]
    %v153 = vld [vmem:[%s2 + $0x18] sm:$0xff]
    %v158 = vperm.slane %v150, 0
    %v159 = vperm.slane %v150, 1
    %v160 = vperm.slane %v150, 2
    %v161 = vperm.slane %v150, 3
    %v162 = vperm.slane %v150, 4
    %v163 = vperm.slane %v150, 5
    %v164 = vperm.slane %v150, 6
    %v165 = vperm.slane %v150, 7
    %v166 = vperm.slane %v151, 0
    %v167 = vperm.slane %v151, 1
    %v168 = vperm.slane %v151, 2
    %v169 = vperm.slane %v151, 3
    %v170 = vperm.slane %v151, 4
    %v171 = vperm.slane %v151, 5
    %v172 = vperm.slane %v151, 6
    %v173 = vperm.slane %v151, 7
    %v174 = vperm.slane %v152, 0
    %v175 = vperm.slane %v152, 1
    %v176 = vperm.slane %v152, 2
    %v177 = vperm.slane %v152, 3
    %v178 = vperm.slane %v152, 4
    %v179 = vperm.slane %v152, 5
    %v180 = vperm.slane %v152, 6
    %v181 = vperm.slane %v152, 7
    %v182 = vperm.slane %v153, 0
    %v183 = vperm.slane %v153, 1
    %v184 = vperm.slane %v153, 2
    %v185 = vperm.slane %v153, 3
    %v186 = vperm.slane %v153, 4
    %v187 = vperm.slane %v153, 5
    %v188 = vperm.slane %v153, 6
    %v189 = vperm.slane %v153, 7
    %vm222 = vcmask 261120
    %v224 = vsel %vm222, %v21, 0
    %226 = vmatpush.msra.mxu0 0.0
    %227 = vmatpush.msra.mxu0 0.0
    %228 = vmatpush.msra.mxu0 0.0
    %229 = vmatpush.msra.mxu0 0.0
    %230 = vmatpush.msra.mxu0 0.0
    %231 = vmatpush.msra.mxu0 0.0
    %232 = vmatpush.msra.mxu0 0.0
    %233 = vmatpush.msra.mxu0 0.0
    %234 = vmatpush.msra.mxu0 0.0
    %235 = vmatpush.msra.mxu0 0.0
    %236 = vmatpush.msra.mxu0 0.0
    %237 = vmatpush.msra.mxu0 0.0
    %238 = vmatpush.msra.mxu0 %v118
    %239 = vmatpush.msra.mxu0 %v86
    %240 = vmatpush.msra.mxu0 %v54
    %241 = vmatpush.msra.mxu0 %v22
    %242 = vmatmul.f32.gmra.mxu0 %v224
    %v243 = vpop.f32.mrf.mxu0
    %v244 = vadd.f32 %v158, %v243
    %245 = vdwg.mxu0
    %246 = vmatpush.msra.mxu0 0.0
    %247 = vmatpush.msra.mxu0 0.0
    %248 = vmatpush.msra.mxu0 0.0
    %249 = vmatpush.msra.mxu0 0.0
    %250 = vmatpush.msra.mxu0 0.0
    %251 = vmatpush.msra.mxu0 0.0
    %252 = vmatpush.msra.mxu0 0.0
    %253 = vmatpush.msra.mxu0 0.0
    %254 = vmatpush.msra.mxu0 0.0
    %255 = vmatpush.msra.mxu0 0.0
    %256 = vmatpush.msra.mxu0 0.0
    %257 = vmatpush.msra.mxu0 0.0
    %258 = vmatpush.msra.mxu0 %v119
    %259 = vmatpush.msra.mxu0 %v87
    %260 = vmatpush.msra.mxu0 %v55
    %261 = vmatpush.msra.mxu0 %v23
    %262 = vmatmul.f32.gmra.mxu0 %v224
    %v263 = vpop.f32.mrf.mxu0
    %v264 = vadd.f32 %v159, %v263
    %265 = vdwg.mxu0
    %266 = vmatpush.msra.mxu0 0.0
    %267 = vmatpush.msra.mxu0 0.0
    %268 = vmatpush.msra.mxu0 0.0
    %269 = vmatpush.msra.mxu0 0.0
    %270 = vmatpush.msra.mxu0 0.0
    %271 = vmatpush.msra.mxu0 0.0
    %272 = vmatpush.msra.mxu0 0.0
    %273 = vmatpush.msra.mxu0 0.0
    %274 = vmatpush.msra.mxu0 0.0
    %275 = vmatpush.msra.mxu0 0.0
    %276 = vmatpush.msra.mxu0 0.0
    %277 = vmatpush.msra.mxu0 0.0
    %278 = vmatpush.msra.mxu0 %v120
    %279 = vmatpush.msra.mxu0 %v88
    %280 = vmatpush.msra.mxu0 %v56
    %281 = vmatpush.msra.mxu0 %v24
    %282 = vmatmul.f32.gmra.mxu0 %v224
    %v283 = vpop.f32.mrf.mxu0
    %v284 = vadd.f32 %v160, %v283
    %285 = vdwg.mxu0
    %286 = vmatpush.msra.mxu0 0.0
    %287 = vmatpush.msra.mxu0 0.0
    %288 = vmatpush.msra.mxu0 0.0
    %289 = vmatpush.msra.mxu0 0.0
    %290 = vmatpush.msra.mxu0 0.0
    %291 = vmatpush.msra.mxu0 0.0
    %292 = vmatpush.msra.mxu0 0.0
    %293 = vmatpush.msra.mxu0 0.0
    %294 = vmatpush.msra.mxu0 0.0
    %295 = vmatpush.msra.mxu0 0.0
    %296 = vmatpush.msra.mxu0 0.0
    %297 = vmatpush.msra.mxu0 0.0
    %298 = vmatpush.msra.mxu0 %v121
    %299 = vmatpush.msra.mxu0 %v89
    %300 = vmatpush.msra.mxu0 %v57
    %301 = vmatpush.msra.mxu0 %v25
    %302 = vmatmul.f32.gmra.mxu0 %v224
    %v303 = vpop.f32.mrf.mxu0
    %v304 = vadd.f32 %v161, %v303
    %305 = vdwg.mxu0
    %306 = vmatpush.msra.mxu0 0.0
    %307 = vmatpush.msra.mxu0 0.0
    %308 = vmatpush.msra.mxu0 0.0
    %309 = vmatpush.msra.mxu0 0.0
    %310 = vmatpush.msra.mxu0 0.0
    %311 = vmatpush.msra.mxu0 0.0
    %312 = vmatpush.msra.mxu0 0.0
    %313 = vmatpush.msra.mxu0 0.0
    %314 = vmatpush.msra.mxu0 0.0
    %315 = vmatpush.msra.mxu0 0.0
    %316 = vmatpush.msra.mxu0 0.0
    %317 = vmatpush.msra.mxu0 0.0
    %318 = vmatpush.msra.mxu0 %v122
    %319 = vmatpush.msra.mxu0 %v90
    %320 = vmatpush.msra.mxu0 %v58
    %321 = vmatpush.msra.mxu0 %v26
    %322 = vmatmul.f32.gmra.mxu0 %v224
    %v323 = vpop.f32.mrf.mxu0
    %v324 = vadd.f32 %v162, %v323
    %325 = vdwg.mxu0
    %326 = vmatpush.msra.mxu0 0.0
    %327 = vmatpush.msra.mxu0 0.0
    %328 = vmatpush.msra.mxu0 0.0
    %329 = vmatpush.msra.mxu0 0.0
    %330 = vmatpush.msra.mxu0 0.0
    %331 = vmatpush.msra.mxu0 0.0
    %332 = vmatpush.msra.mxu0 0.0
    %333 = vmatpush.msra.mxu0 0.0
    %334 = vmatpush.msra.mxu0 0.0
    %335 = vmatpush.msra.mxu0 0.0
    %336 = vmatpush.msra.mxu0 0.0
    %337 = vmatpush.msra.mxu0 0.0
    %338 = vmatpush.msra.mxu0 %v123
    %339 = vmatpush.msra.mxu0 %v91
    %340 = vmatpush.msra.mxu0 %v59
    %341 = vmatpush.msra.mxu0 %v27
    %342 = vmatmul.f32.gmra.mxu0 %v224
    %v343 = vpop.f32.mrf.mxu0
    %v344 = vadd.f32 %v163, %v343
    %345 = vdwg.mxu0
    %346 = vmatpush.msra.mxu0 0.0
    %347 = vmatpush.msra.mxu0 0.0
    %348 = vmatpush.msra.mxu0 0.0
    %349 = vmatpush.msra.mxu0 0.0
    %350 = vmatpush.msra.mxu0 0.0
    %351 = vmatpush.msra.mxu0 0.0
    %352 = vmatpush.msra.mxu0 0.0
    %353 = vmatpush.msra.mxu0 0.0
    %354 = vmatpush.msra.mxu0 0.0
    %355 = vmatpush.msra.mxu0 0.0
    %356 = vmatpush.msra.mxu0 0.0
    %357 = vmatpush.msra.mxu0 0.0
    %358 = vmatpush.msra.mxu0 %v124
    %359 = vmatpush.msra.mxu0 %v92
    %360 = vmatpush.msra.mxu0 %v60
    %361 = vmatpush.msra.mxu0 %v28
    %362 = vmatmul.f32.gmra.mxu0 %v224
    %v363 = vpop.f32.mrf.mxu0
    %v364 = vadd.f32 %v164, %v363
    %365 = vdwg.mxu0
    %366 = vmatpush.msra.mxu0 0.0
    %367 = vmatpush.msra.mxu0 0.0
    %368 = vmatpush.msra.mxu0 0.0
    %369 = vmatpush.msra.mxu0 0.0
    %370 = vmatpush.msra.mxu0 0.0
    %371 = vmatpush.msra.mxu0 0.0
    %372 = vmatpush.msra.mxu0 0.0
    %373 = vmatpush.msra.mxu0 0.0
    %374 = vmatpush.msra.mxu0 0.0
    %375 = vmatpush.msra.mxu0 0.0
    %376 = vmatpush.msra.mxu0 0.0
    %377 = vmatpush.msra.mxu0 0.0
    %378 = vmatpush.msra.mxu0 %v125
    %379 = vmatpush.msra.mxu0 %v93
    %380 = vmatpush.msra.mxu0 %v61
    %381 = vmatpush.msra.mxu0 %v29
    %382 = vmatmul.f32.gmra.mxu0 %v224
    %v383 = vpop.f32.mrf.mxu0
    %v384 = vadd.f32 %v165, %v383
    %385 = vdwg.mxu0
    %386 = vmatpush.msra.mxu0 0.0
    %387 = vmatpush.msra.mxu0 0.0
    %388 = vmatpush.msra.mxu0 0.0
    %389 = vmatpush.msra.mxu0 0.0
    %390 = vmatpush.msra.mxu0 0.0
    %391 = vmatpush.msra.mxu0 0.0
    %392 = vmatpush.msra.mxu0 0.0
    %393 = vmatpush.msra.mxu0 0.0
    %394 = vmatpush.msra.mxu0 0.0
    %395 = vmatpush.msra.mxu0 0.0
    %396 = vmatpush.msra.mxu0 0.0
    %397 = vmatpush.msra.mxu0 0.0
    %398 = vmatpush.msra.mxu0 %v126
    %399 = vmatpush.msra.mxu0 %v94
    %400 = vmatpush.msra.mxu0 %v62
    %401 = vmatpush.msra.mxu0 %v30
    %402 = vmatmul.f32.gmra.mxu0 %v224
    %v403 = vpop.f32.mrf.mxu0
    %v404 = vadd.f32 %v166, %v403
    %405 = vdwg.mxu0
    %406 = vmatpush.msra.mxu0 0.0
    %407 = vmatpush.msra.mxu0 0.0
    %408 = vmatpush.msra.mxu0 0.0
    %409 = vmatpush.msra.mxu0 0.0
    %410 = vmatpush.msra.mxu0 0.0
    %411 = vmatpush.msra.mxu0 0.0
    %412 = vmatpush.msra.mxu0 0.0
    %413 = vmatpush.msra.mxu0 0.0
    %414 = vmatpush.msra.mxu0 0.0
    %415 = vmatpush.msra.mxu0 0.0
    %416 = vmatpush.msra.mxu0 0.0
    %417 = vmatpush.msra.mxu0 0.0
    %418 = vmatpush.msra.mxu0 %v127
    %419 = vmatpush.msra.mxu0 %v95
    %420 = vmatpush.msra.mxu0 %v63
    %421 = vmatpush.msra.mxu0 %v31
    %422 = vmatmul.f32.gmra.mxu0 %v224
    %v423 = vpop.f32.mrf.mxu0
    %v424 = vadd.f32 %v167, %v423
    %425 = vdwg.mxu0
    %426 = vmatpush.msra.mxu0 0.0
    %427 = vmatpush.msra.mxu0 0.0
    %428 = vmatpush.msra.mxu0 0.0
    %429 = vmatpush.msra.mxu0 0.0
    %430 = vmatpush.msra.mxu0 0.0
    %431 = vmatpush.msra.mxu0 0.0
    %432 = vmatpush.msra.mxu0 0.0
    %433 = vmatpush.msra.mxu0 0.0
    %434 = vmatpush.msra.mxu0 0.0
    %435 = vmatpush.msra.mxu0 0.0
    %436 = vmatpush.msra.mxu0 0.0
    %437 = vmatpush.msra.mxu0 0.0
    %438 = vmatpush.msra.mxu0 %v128
    %439 = vmatpush.msra.mxu0 %v96
    %440 = vmatpush.msra.mxu0 %v64
    %441 = vmatpush.msra.mxu0 %v32
    %442 = vmatmul.f32.gmra.mxu0 %v224
    %v443 = vpop.f32.mrf.mxu0
    %v444 = vadd.f32 %v168, %v443
    %445 = vdwg.mxu0
    %446 = vmatpush.msra.mxu0 0.0
    %447 = vmatpush.msra.mxu0 0.0
    %448 = vmatpush.msra.mxu0 0.0
    %449 = vmatpush.msra.mxu0 0.0
    %450 = vmatpush.msra.mxu0 0.0
    %451 = vmatpush.msra.mxu0 0.0
    %452 = vmatpush.msra.mxu0 0.0
    %453 = vmatpush.msra.mxu0 0.0
    %454 = vmatpush.msra.mxu0 0.0
    %455 = vmatpush.msra.mxu0 0.0
    %456 = vmatpush.msra.mxu0 0.0
    %457 = vmatpush.msra.mxu0 0.0
    %458 = vmatpush.msra.mxu0 %v129
    %459 = vmatpush.msra.mxu0 %v97
    %460 = vmatpush.msra.mxu0 %v65
    %461 = vmatpush.msra.mxu0 %v33
    %462 = vmatmul.f32.gmra.mxu0 %v224
    %v463 = vpop.f32.mrf.mxu0
    %v464 = vadd.f32 %v169, %v463
    %465 = vdwg.mxu0
    %466 = vmatpush.msra.mxu0 0.0
    %467 = vmatpush.msra.mxu0 0.0
    %468 = vmatpush.msra.mxu0 0.0
    %469 = vmatpush.msra.mxu0 0.0
    %470 = vmatpush.msra.mxu0 0.0
    %471 = vmatpush.msra.mxu0 0.0
    %472 = vmatpush.msra.mxu0 0.0
    %473 = vmatpush.msra.mxu0 0.0
    %474 = vmatpush.msra.mxu0 0.0
    %475 = vmatpush.msra.mxu0 0.0
    %476 = vmatpush.msra.mxu0 0.0
    %477 = vmatpush.msra.mxu0 0.0
    %478 = vmatpush.msra.mxu0 %v130
    %479 = vmatpush.msra.mxu0 %v98
    %480 = vmatpush.msra.mxu0 %v66
    %481 = vmatpush.msra.mxu0 %v34
    %482 = vmatmul.f32.gmra.mxu0 %v224
    %v483 = vpop.f32.mrf.mxu0
    %v484 = vadd.f32 %v170, %v483
    %485 = vdwg.mxu0
    %486 = vmatpush.msra.mxu0 0.0
    %487 = vmatpush.msra.mxu0 0.0
    %488 = vmatpush.msra.mxu0 0.0
    %489 = vmatpush.msra.mxu0 0.0
    %490 = vmatpush.msra.mxu0 0.0
    %491 = vmatpush.msra.mxu0 0.0
    %492 = vmatpush.msra.mxu0 0.0
    %493 = vmatpush.msra.mxu0 0.0
    %494 = vmatpush.msra.mxu0 0.0
    %495 = vmatpush.msra.mxu0 0.0
    %496 = vmatpush.msra.mxu0 0.0
    %497 = vmatpush.msra.mxu0 0.0
    %498 = vmatpush.msra.mxu0 %v131
    %499 = vmatpush.msra.mxu0 %v99
    %500 = vmatpush.msra.mxu0 %v67
    %501 = vmatpush.msra.mxu0 %v35
    %502 = vmatmul.f32.gmra.mxu0 %v224
    %v503 = vpop.f32.mrf.mxu0
    %v504 = vadd.f32 %v171, %v503
    %505 = vdwg.mxu0
    %506 = vmatpush.msra.mxu0 0.0
    %507 = vmatpush.msra.mxu0 0.0
    %508 = vmatpush.msra.mxu0 0.0
    %509 = vmatpush.msra.mxu0 0.0
    %510 = vmatpush.msra.mxu0 0.0
    %511 = vmatpush.msra.mxu0 0.0
    %512 = vmatpush.msra.mxu0 0.0
    %513 = vmatpush.msra.mxu0 0.0
    %514 = vmatpush.msra.mxu0 0.0
    %515 = vmatpush.msra.mxu0 0.0
    %516 = vmatpush.msra.mxu0 0.0
    %517 = vmatpush.msra.mxu0 0.0
    %518 = vmatpush.msra.mxu0 %v132
    %519 = vmatpush.msra.mxu0 %v100
    %520 = vmatpush.msra.mxu0 %v68
    %521 = vmatpush.msra.mxu0 %v36
    %522 = vmatmul.f32.gmra.mxu0 %v224
    %v523 = vpop.f32.mrf.mxu0
    %v524 = vadd.f32 %v172, %v523
    %525 = vdwg.mxu0
    %526 = vmatpush.msra.mxu0 0.0
    %527 = vmatpush.msra.mxu0 0.0
    %528 = vmatpush.msra.mxu0 0.0
    %529 = vmatpush.msra.mxu0 0.0
    %530 = vmatpush.msra.mxu0 0.0
    %531 = vmatpush.msra.mxu0 0.0
    %532 = vmatpush.msra.mxu0 0.0
    %533 = vmatpush.msra.mxu0 0.0
    %534 = vmatpush.msra.mxu0 0.0
    %535 = vmatpush.msra.mxu0 0.0
    %536 = vmatpush.msra.mxu0 0.0
    %537 = vmatpush.msra.mxu0 0.0
    %538 = vmatpush.msra.mxu0 %v133
    %539 = vmatpush.msra.mxu0 %v101
    %540 = vmatpush.msra.mxu0 %v69
    %541 = vmatpush.msra.mxu0 %v37
    %542 = vmatmul.f32.gmra.mxu0 %v224
    %v543 = vpop.f32.mrf.mxu0
    %v544 = vadd.f32 %v173, %v543
    %545 = vdwg.mxu0
    %546 = vmatpush.msra.mxu0 0.0
    %547 = vmatpush.msra.mxu0 0.0
    %548 = vmatpush.msra.mxu0 0.0
    %549 = vmatpush.msra.mxu0 0.0
    %550 = vmatpush.msra.mxu0 0.0
    %551 = vmatpush.msra.mxu0 0.0
    %552 = vmatpush.msra.mxu0 0.0
    %553 = vmatpush.msra.mxu0 0.0
    %554 = vmatpush.msra.mxu0 0.0
    %555 = vmatpush.msra.mxu0 0.0
    %556 = vmatpush.msra.mxu0 0.0
    %557 = vmatpush.msra.mxu0 0.0
    %558 = vmatpush.msra.mxu0 %v134
    %559 = vmatpush.msra.mxu0 %v102
    %560 = vmatpush.msra.mxu0 %v70
    %561 = vmatpush.msra.mxu0 %v38
    %562 = vmatmul.f32.gmra.mxu0 %v224
    %v563 = vpop.f32.mrf.mxu0
    %v564 = vadd.f32 %v174, %v563
    %565 = vdwg.mxu0
    %566 = vmatpush.msra.mxu0 0.0
    %567 = vmatpush.msra.mxu0 0.0
    %568 = vmatpush.msra.mxu0 0.0
    %569 = vmatpush.msra.mxu0 0.0
    %570 = vmatpush.msra.mxu0 0.0
    %571 = vmatpush.msra.mxu0 0.0
    %572 = vmatpush.msra.mxu0 0.0
    %573 = vmatpush.msra.mxu0 0.0
    %574 = vmatpush.msra.mxu0 0.0
    %575 = vmatpush.msra.mxu0 0.0
    %576 = vmatpush.msra.mxu0 0.0
    %577 = vmatpush.msra.mxu0 0.0
    %578 = vmatpush.msra.mxu0 %v135
    %579 = vmatpush.msra.mxu0 %v103
    %580 = vmatpush.msra.mxu0 %v71
    %581 = vmatpush.msra.mxu0 %v39
    %582 = vmatmul.f32.gmra.mxu0 %v224
    %v583 = vpop.f32.mrf.mxu0
    %v584 = vadd.f32 %v175, %v583
    %585 = vdwg.mxu0
    %586 = vmatpush.msra.mxu0 0.0
    %587 = vmatpush.msra.mxu0 0.0
    %588 = vmatpush.msra.mxu0 0.0
    %589 = vmatpush.msra.mxu0 0.0
    %590 = vmatpush.msra.mxu0 0.0
    %591 = vmatpush.msra.mxu0 0.0
    %592 = vmatpush.msra.mxu0 0.0
    %593 = vmatpush.msra.mxu0 0.0
    %594 = vmatpush.msra.mxu0 0.0
    %595 = vmatpush.msra.mxu0 0.0
    %596 = vmatpush.msra.mxu0 0.0
    %597 = vmatpush.msra.mxu0 0.0
    %598 = vmatpush.msra.mxu0 %v136
    %599 = vmatpush.msra.mxu0 %v104
    %600 = vmatpush.msra.mxu0 %v72
    %601 = vmatpush.msra.mxu0 %v40
    %602 = vmatmul.f32.gmra.mxu0 %v224
    %v603 = vpop.f32.mrf.mxu0
    %v604 = vadd.f32 %v176, %v603
    %605 = vdwg.mxu0
    %606 = vmatpush.msra.mxu0 0.0
    %607 = vmatpush.msra.mxu0 0.0
    %608 = vmatpush.msra.mxu0 0.0
    %609 = vmatpush.msra.mxu0 0.0
    %610 = vmatpush.msra.mxu0 0.0
    %611 = vmatpush.msra.mxu0 0.0
    %612 = vmatpush.msra.mxu0 0.0
    %613 = vmatpush.msra.mxu0 0.0
    %614 = vmatpush.msra.mxu0 0.0
    %615 = vmatpush.msra.mxu0 0.0
    %616 = vmatpush.msra.mxu0 0.0
    %617 = vmatpush.msra.mxu0 0.0
    %618 = vmatpush.msra.mxu0 %v137
    %619 = vmatpush.msra.mxu0 %v105
    %620 = vmatpush.msra.mxu0 %v73
    %621 = vmatpush.msra.mxu0 %v41
    %622 = vmatmul.f32.gmra.mxu0 %v224
    %v623 = vpop.f32.mrf.mxu0
    %v624 = vadd.f32 %v177, %v623
    %625 = vdwg.mxu0
    %626 = vmatpush.msra.mxu0 0.0
    %627 = vmatpush.msra.mxu0 0.0
    %628 = vmatpush.msra.mxu0 0.0
    %629 = vmatpush.msra.mxu0 0.0
    %630 = vmatpush.msra.mxu0 0.0
    %631 = vmatpush.msra.mxu0 0.0
    %632 = vmatpush.msra.mxu0 0.0
    %633 = vmatpush.msra.mxu0 0.0
    %634 = vmatpush.msra.mxu0 0.0
    %635 = vmatpush.msra.mxu0 0.0
    %636 = vmatpush.msra.mxu0 0.0
    %637 = vmatpush.msra.mxu0 0.0
    %638 = vmatpush.msra.mxu0 %v138
    %639 = vmatpush.msra.mxu0 %v106
    %640 = vmatpush.msra.mxu0 %v74
    %641 = vmatpush.msra.mxu0 %v42
    %642 = vmatmul.f32.gmra.mxu0 %v224
    %v643 = vpop.f32.mrf.mxu0
    %v644 = vadd.f32 %v178, %v643
    %645 = vdwg.mxu0
    %646 = vmatpush.msra.mxu0 0.0
    %647 = vmatpush.msra.mxu0 0.0
    %648 = vmatpush.msra.mxu0 0.0
    %649 = vmatpush.msra.mxu0 0.0
    %650 = vmatpush.msra.mxu0 0.0
    %651 = vmatpush.msra.mxu0 0.0
    %652 = vmatpush.msra.mxu0 0.0
    %653 = vmatpush.msra.mxu0 0.0
    %654 = vmatpush.msra.mxu0 0.0
    %655 = vmatpush.msra.mxu0 0.0
    %656 = vmatpush.msra.mxu0 0.0
    %657 = vmatpush.msra.mxu0 0.0
    %658 = vmatpush.msra.mxu0 %v139
    %659 = vmatpush.msra.mxu0 %v107
    %660 = vmatpush.msra.mxu0 %v75
    %661 = vmatpush.msra.mxu0 %v43
    %662 = vmatmul.f32.gmra.mxu0 %v224
    %v663 = vpop.f32.mrf.mxu0
    %v664 = vadd.f32 %v179, %v663
    %665 = vdwg.mxu0
    %666 = vmatpush.msra.mxu0 0.0
    %667 = vmatpush.msra.mxu0 0.0
    %668 = vmatpush.msra.mxu0 0.0
    %669 = vmatpush.msra.mxu0 0.0
    %670 = vmatpush.msra.mxu0 0.0
    %671 = vmatpush.msra.mxu0 0.0
    %672 = vmatpush.msra.mxu0 0.0
    %673 = vmatpush.msra.mxu0 0.0
    %674 = vmatpush.msra.mxu0 0.0
    %675 = vmatpush.msra.mxu0 0.0
    %676 = vmatpush.msra.mxu0 0.0
    %677 = vmatpush.msra.mxu0 0.0
    %678 = vmatpush.msra.mxu0 %v140
    %679 = vmatpush.msra.mxu0 %v108
    %680 = vmatpush.msra.mxu0 %v76
    %681 = vmatpush.msra.mxu0 %v44
    %682 = vmatmul.f32.gmra.mxu0 %v224
    %v683 = vpop.f32.mrf.mxu0
    %v684 = vadd.f32 %v180, %v683
    %685 = vdwg.mxu0
    %686 = vmatpush.msra.mxu0 0.0
    %687 = vmatpush.msra.mxu0 0.0
    %688 = vmatpush.msra.mxu0 0.0
    %689 = vmatpush.msra.mxu0 0.0
    %690 = vmatpush.msra.mxu0 0.0
    %691 = vmatpush.msra.mxu0 0.0
    %692 = vmatpush.msra.mxu0 0.0
    %693 = vmatpush.msra.mxu0 0.0
    %694 = vmatpush.msra.mxu0 0.0
    %695 = vmatpush.msra.mxu0 0.0
    %696 = vmatpush.msra.mxu0 0.0
    %697 = vmatpush.msra.mxu0 0.0
    %698 = vmatpush.msra.mxu0 %v141
    %699 = vmatpush.msra.mxu0 %v109
    %700 = vmatpush.msra.mxu0 %v77
    %701 = vmatpush.msra.mxu0 %v45
    %702 = vmatmul.f32.gmra.mxu0 %v224
    %v703 = vpop.f32.mrf.mxu0
    %v704 = vadd.f32 %v181, %v703
    %705 = vdwg.mxu0
    %706 = vmatpush.msra.mxu0 0.0
    %707 = vmatpush.msra.mxu0 0.0
    %708 = vmatpush.msra.mxu0 0.0
    %709 = vmatpush.msra.mxu0 0.0
    %710 = vmatpush.msra.mxu0 0.0
    %711 = vmatpush.msra.mxu0 0.0
    %712 = vmatpush.msra.mxu0 0.0
    %713 = vmatpush.msra.mxu0 0.0
    %714 = vmatpush.msra.mxu0 0.0
    %715 = vmatpush.msra.mxu0 0.0
    %716 = vmatpush.msra.mxu0 0.0
    %717 = vmatpush.msra.mxu0 0.0
    %718 = vmatpush.msra.mxu0 %v142
    %719 = vmatpush.msra.mxu0 %v110
    %720 = vmatpush.msra.mxu0 %v78
    %721 = vmatpush.msra.mxu0 %v46
    %722 = vmatmul.f32.gmra.mxu0 %v224
    %v723 = vpop.f32.mrf.mxu0
    %v724 = vadd.f32 %v182, %v723
    %725 = vdwg.mxu0
    %726 = vmatpush.msra.mxu0 0.0
    %727 = vmatpush.msra.mxu0 0.0
    %728 = vmatpush.msra.mxu0 0.0
    %729 = vmatpush.msra.mxu0 0.0
    %730 = vmatpush.msra.mxu0 0.0
    %731 = vmatpush.msra.mxu0 0.0
    %732 = vmatpush.msra.mxu0 0.0
    %733 = vmatpush.msra.mxu0 0.0
    %734 = vmatpush.msra.mxu0 0.0
    %735 = vmatpush.msra.mxu0 0.0
    %736 = vmatpush.msra.mxu0 0.0
    %737 = vmatpush.msra.mxu0 0.0
    %738 = vmatpush.msra.mxu0 %v143
    %739 = vmatpush.msra.mxu0 %v111
    %740 = vmatpush.msra.mxu0 %v79
    %741 = vmatpush.msra.mxu0 %v47
    %742 = vmatmul.f32.gmra.mxu0 %v224
    %v743 = vpop.f32.mrf.mxu0
    %v744 = vadd.f32 %v183, %v743
    %745 = vdwg.mxu0
    %746 = vmatpush.msra.mxu0 0.0
    %747 = vmatpush.msra.mxu0 0.0
    %748 = vmatpush.msra.mxu0 0.0
    %749 = vmatpush.msra.mxu0 0.0
    %750 = vmatpush.msra.mxu0 0.0
    %751 = vmatpush.msra.mxu0 0.0
    %752 = vmatpush.msra.mxu0 0.0
    %753 = vmatpush.msra.mxu0 0.0
    %754 = vmatpush.msra.mxu0 0.0
    %755 = vmatpush.msra.mxu0 0.0
    %756 = vmatpush.msra.mxu0 0.0
    %757 = vmatpush.msra.mxu0 0.0
    %758 = vmatpush.msra.mxu0 %v144
    %759 = vmatpush.msra.mxu0 %v112
    %760 = vmatpush.msra.mxu0 %v80
    %761 = vmatpush.msra.mxu0 %v48
    %762 = vmatmul.f32.gmra.mxu0 %v224
    %v763 = vpop.f32.mrf.mxu0
    %v764 = vadd.f32 %v184, %v763
    %765 = vdwg.mxu0
    %766 = vmatpush.msra.mxu0 0.0
    %767 = vmatpush.msra.mxu0 0.0
    %768 = vmatpush.msra.mxu0 0.0
    %769 = vmatpush.msra.mxu0 0.0
    %770 = vmatpush.msra.mxu0 0.0
    %771 = vmatpush.msra.mxu0 0.0
    %772 = vmatpush.msra.mxu0 0.0
    %773 = vmatpush.msra.mxu0 0.0
    %774 = vmatpush.msra.mxu0 0.0
    %775 = vmatpush.msra.mxu0 0.0
    %776 = vmatpush.msra.mxu0 0.0
    %777 = vmatpush.msra.mxu0 0.0
    %778 = vmatpush.msra.mxu0 %v145
    %779 = vmatpush.msra.mxu0 %v113
    %780 = vmatpush.msra.mxu0 %v81
    %781 = vmatpush.msra.mxu0 %v49
    %782 = vmatmul.f32.gmra.mxu0 %v224
    %v783 = vpop.f32.mrf.mxu0
    %v784 = vadd.f32 %v185, %v783
    %785 = vdwg.mxu0
    %786 = vmatpush.msra.mxu0 0.0
    %787 = vmatpush.msra.mxu0 0.0
    %788 = vmatpush.msra.mxu0 0.0
    %789 = vmatpush.msra.mxu0 0.0
    %790 = vmatpush.msra.mxu0 0.0
    %791 = vmatpush.msra.mxu0 0.0
    %792 = vmatpush.msra.mxu0 0.0
    %793 = vmatpush.msra.mxu0 0.0
    %794 = vmatpush.msra.mxu0 0.0
    %795 = vmatpush.msra.mxu0 0.0
    %796 = vmatpush.msra.mxu0 0.0
    %797 = vmatpush.msra.mxu0 0.0
    %798 = vmatpush.msra.mxu0 %v146
    %799 = vmatpush.msra.mxu0 %v114
    %800 = vmatpush.msra.mxu0 %v82
    %801 = vmatpush.msra.mxu0 %v50
    %802 = vmatmul.f32.gmra.mxu0 %v224
    %v803 = vpop.f32.mrf.mxu0
    %v804 = vadd.f32 %v186, %v803
    %805 = vdwg.mxu0
    %806 = vmatpush.msra.mxu0 0.0
    %807 = vmatpush.msra.mxu0 0.0
    %808 = vmatpush.msra.mxu0 0.0
    %809 = vmatpush.msra.mxu0 0.0
    %810 = vmatpush.msra.mxu0 0.0
    %811 = vmatpush.msra.mxu0 0.0
    %812 = vmatpush.msra.mxu0 0.0
    %813 = vmatpush.msra.mxu0 0.0
    %814 = vmatpush.msra.mxu0 0.0
    %815 = vmatpush.msra.mxu0 0.0
    %816 = vmatpush.msra.mxu0 0.0
    %817 = vmatpush.msra.mxu0 0.0
    %818 = vmatpush.msra.mxu0 %v147
    %819 = vmatpush.msra.mxu0 %v115
    %820 = vmatpush.msra.mxu0 %v83
    %821 = vmatpush.msra.mxu0 %v51
    %822 = vmatmul.f32.gmra.mxu0 %v224
    %v823 = vpop.f32.mrf.mxu0
    %v824 = vadd.f32 %v187, %v823
    %825 = vdwg.mxu0
    %826 = vmatpush.msra.mxu0 0.0
    %827 = vmatpush.msra.mxu0 0.0
    %828 = vmatpush.msra.mxu0 0.0
    %829 = vmatpush.msra.mxu0 0.0
    %830 = vmatpush.msra.mxu0 0.0
    %831 = vmatpush.msra.mxu0 0.0
    %832 = vmatpush.msra.mxu0 0.0
    %833 = vmatpush.msra.mxu0 0.0
    %834 = vmatpush.msra.mxu0 0.0
    %835 = vmatpush.msra.mxu0 0.0
    %836 = vmatpush.msra.mxu0 0.0
    %837 = vmatpush.msra.mxu0 0.0
    %838 = vmatpush.msra.mxu0 %v148
    %839 = vmatpush.msra.mxu0 %v116
    %840 = vmatpush.msra.mxu0 %v84
    %841 = vmatpush.msra.mxu0 %v52
    %842 = vmatmul.f32.gmra.mxu0 %v224
    %v843 = vpop.f32.mrf.mxu0
    %v844 = vadd.f32 %v188, %v843
    %845 = vdwg.mxu0
    %846 = vmatpush.msra.mxu0 0.0
    %847 = vmatpush.msra.mxu0 0.0
    %848 = vmatpush.msra.mxu0 0.0
    %849 = vmatpush.msra.mxu0 0.0
    %850 = vmatpush.msra.mxu0 0.0
    %851 = vmatpush.msra.mxu0 0.0
    %852 = vmatpush.msra.mxu0 0.0
    %853 = vmatpush.msra.mxu0 0.0
    %854 = vmatpush.msra.mxu0 0.0
    %855 = vmatpush.msra.mxu0 0.0
    %856 = vmatpush.msra.mxu0 0.0
    %857 = vmatpush.msra.mxu0 0.0
    %858 = vmatpush.msra.mxu0 %v149
    %859 = vmatpush.msra.mxu0 %v117
    %860 = vmatpush.msra.mxu0 %v85
    %861 = vmatpush.msra.mxu0 %v53
    %862 = vmatmul.f32.gmra.mxu0 %v224
    %v863 = vpop.f32.mrf.mxu0
    %v864 = vadd.f32 %v189, %v863
    %865 = vdwg.mxu0
    %v866 = vmax.f32 %v244, 0.0
    %v867 = vmax.f32 %v264, 0.0
    %v868 = vmax.f32 %v284, 0.0
    %v869 = vmax.f32 %v304, 0.0
    %v870 = vmax.f32 %v324, 0.0
    %v871 = vmax.f32 %v344, 0.0
    %v872 = vmax.f32 %v364, 0.0
    %v873 = vmax.f32 %v384, 0.0
    %v874 = vmax.f32 %v404, 0.0
    %v875 = vmax.f32 %v424, 0.0
    %v876 = vmax.f32 %v444, 0.0
    %v877 = vmax.f32 %v464, 0.0
    %v878 = vmax.f32 %v484, 0.0
    %v879 = vmax.f32 %v504, 0.0
    %v880 = vmax.f32 %v524, 0.0
    %v881 = vmax.f32 %v544, 0.0
    %v882 = vmax.f32 %v564, 0.0
    %v883 = vmax.f32 %v584, 0.0
    %v884 = vmax.f32 %v604, 0.0
    %v885 = vmax.f32 %v624, 0.0
    %v886 = vmax.f32 %v644, 0.0
    %v887 = vmax.f32 %v664, 0.0
    %v888 = vmax.f32 %v684, 0.0
    %v889 = vmax.f32 %v704, 0.0
    %v890 = vmax.f32 %v724, 0.0
    %v891 = vmax.f32 %v744, 0.0
    %v892 = vmax.f32 %v764, 0.0
    %v893 = vmax.f32 %v784, 0.0
    %v894 = vmax.f32 %v804, 0.0
    %v895 = vmax.f32 %v824, 0.0
    %v896 = vmax.f32 %v844, 0.0
    %v897 = vmax.f32 %v864, 0.0
    %v898 = vld [vmem:[%s3] sm:$0xff]
    %v899 = vld [vmem:[%s3 + $0x8] sm:$0xff]
    %v900 = vld [vmem:[%s3 + $0x10] sm:$0xff]
    %v901 = vld [vmem:[%s3 + $0x18] sm:$0xff]
    %v902 = vld [vmem:[%s3 + $0x20] sm:$0xff]
    %v903 = vld [vmem:[%s3 + $0x28] sm:$0xff]
    %v904 = vld [vmem:[%s3 + $0x30] sm:$0xff]
    %v905 = vld [vmem:[%s3 + $0x38] sm:$0xff]
    %v906 = vld [vmem:[%s3 + $0x40] sm:$0xff]
    %v907 = vld [vmem:[%s3 + $0x48] sm:$0xff]
    %v908 = vld [vmem:[%s3 + $0x50] sm:$0xff]
    %v909 = vld [vmem:[%s3 + $0x58] sm:$0xff]
    %v910 = vld [vmem:[%s3 + $0x60] sm:$0xff]
    %v911 = vld [vmem:[%s3 + $0x68] sm:$0xff]
    %v912 = vld [vmem:[%s3 + $0x70] sm:$0xff]
    %v913 = vld [vmem:[%s3 + $0x78] sm:$0xff]
    %v914 = vld [vmem:[%s3 + $0x80] sm:$0xff]
    %v915 = vld [vmem:[%s3 + $0x88] sm:$0xff]
    %v916 = vld [vmem:[%s3 + $0x90] sm:$0xff]
    %v917 = vld [vmem:[%s3 + $0x98] sm:$0xff]
    %v918 = vld [vmem:[%s3 + $0xa0] sm:$0xff]
    %v919 = vld [vmem:[%s3 + $0xa8] sm:$0xff]
    %v920 = vld [vmem:[%s3 + $0xb0] sm:$0xff]
    %v921 = vld [vmem:[%s3 + $0xb8] sm:$0xff]
    %v922 = vld [vmem:[%s3 + $0xc0] sm:$0xff]
    %v923 = vld [vmem:[%s3 + $0xc8] sm:$0xff]
    %v924 = vld [vmem:[%s3 + $0xd0] sm:$0xff]
    %v925 = vld [vmem:[%s3 + $0xd8] sm:$0xff]
    %v926 = vld [vmem:[%s3 + $0xe0] sm:$0xff]
    %v927 = vld [vmem:[%s3 + $0xe8] sm:$0xff]
    %v928 = vld [vmem:[%s3 + $0xf0] sm:$0xff]
    %v929 = vld [vmem:[%s3 + $0xf8] sm:$0xff]
    %v930 = vld [vmem:[%s3 + $0x100] sm:$0xff]
    %v931 = vld [vmem:[%s3 + $0x108] sm:$0xff]
    %v932 = vld [vmem:[%s3 + $0x110] sm:$0xff]
    %v933 = vld [vmem:[%s3 + $0x118] sm:$0xff]
    %v934 = vld [vmem:[%s3 + $0x120] sm:$0xff]
    %v935 = vld [vmem:[%s3 + $0x128] sm:$0xff]
    %v936 = vld [vmem:[%s3 + $0x130] sm:$0xff]
    %v937 = vld [vmem:[%s3 + $0x138] sm:$0xff]
    %v938 = vld [vmem:[%s3 + $0x140] sm:$0xff]
    %v939 = vld [vmem:[%s3 + $0x148] sm:$0xff]
    %v940 = vld [vmem:[%s3 + $0x150] sm:$0xff]
    %v941 = vld [vmem:[%s3 + $0x158] sm:$0xff]
    %v942 = vld [vmem:[%s3 + $0x160] sm:$0xff]
    %v943 = vld [vmem:[%s3 + $0x168] sm:$0xff]
    %v944 = vld [vmem:[%s3 + $0x170] sm:$0xff]
    %v945 = vld [vmem:[%s3 + $0x178] sm:$0xff]
    %v946 = vld [vmem:[%s3 + $0x180] sm:$0xff]
    %v947 = vld [vmem:[%s3 + $0x188] sm:$0xff]
    %v948 = vld [vmem:[%s3 + $0x190] sm:$0xff]
    %v949 = vld [vmem:[%s3 + $0x198] sm:$0xff]
    %v950 = vld [vmem:[%s3 + $0x1a0] sm:$0xff]
    %v951 = vld [vmem:[%s3 + $0x1a8] sm:$0xff]
    %v952 = vld [vmem:[%s3 + $0x1b0] sm:$0xff]
    %v953 = vld [vmem:[%s3 + $0x1b8] sm:$0xff]
    %v954 = vld [vmem:[%s3 + $0x1c0] sm:$0xff]
    %v955 = vld [vmem:[%s3 + $0x1c8] sm:$0xff]
    %v956 = vld [vmem:[%s3 + $0x1d0] sm:$0xff]
    %v957 = vld [vmem:[%s3 + $0x1d8] sm:$0xff]
    %v958 = vld [vmem:[%s3 + $0x1e0] sm:$0xff]
    %v959 = vld [vmem:[%s3 + $0x1e8] sm:$0xff]
    %v960 = vld [vmem:[%s3 + $0x1f0] sm:$0xff]
    %v961 = vld [vmem:[%s3 + $0x1f8] sm:$0xff]
    %v962 = vld [vmem:[%s3 + $0x200] sm:$0xff]
    %v963 = vld [vmem:[%s3 + $0x208] sm:$0xff]
    %v964 = vld [vmem:[%s3 + $0x210] sm:$0xff]
    %v965 = vld [vmem:[%s3 + $0x218] sm:$0xff]
    %v966 = vld [vmem:[%s3 + $0x220] sm:$0xff]
    %v967 = vld [vmem:[%s3 + $0x228] sm:$0xff]
    %v968 = vld [vmem:[%s3 + $0x230] sm:$0xff]
    %v969 = vld [vmem:[%s3 + $0x238] sm:$0xff]
    %v970 = vld [vmem:[%s3 + $0x240] sm:$0xff]
    %v971 = vld [vmem:[%s3 + $0x248] sm:$0xff]
    %v972 = vld [vmem:[%s3 + $0x250] sm:$0xff]
    %v973 = vld [vmem:[%s3 + $0x258] sm:$0xff]
    %v974 = vld [vmem:[%s3 + $0x260] sm:$0xff]
    %v975 = vld [vmem:[%s3 + $0x268] sm:$0xff]
    %v976 = vld [vmem:[%s3 + $0x270] sm:$0xff]
    %v977 = vld [vmem:[%s3 + $0x278] sm:$0xff]
    %v978 = vld [vmem:[%s3 + $0x280] sm:$0xff]
    %v979 = vld [vmem:[%s3 + $0x288] sm:$0xff]
    %v980 = vld [vmem:[%s3 + $0x290] sm:$0xff]
    %v981 = vld [vmem:[%s3 + $0x298] sm:$0xff]
    %v982 = vld [vmem:[%s3 + $0x2a0] sm:$0xff]
    %v983 = vld [vmem:[%s3 + $0x2a8] sm:$0xff]
    %v984 = vld [vmem:[%s3 + $0x2b0] sm:$0xff]
    %v985 = vld [vmem:[%s3 + $0x2b8] sm:$0xff]
    %v986 = vld [vmem:[%s3 + $0x2c0] sm:$0xff]
    %v987 = vld [vmem:[%s3 + $0x2c8] sm:$0xff]
    %v988 = vld [vmem:[%s3 + $0x2d0] sm:$0xff]
    %v989 = vld [vmem:[%s3 + $0x2d8] sm:$0xff]
    %v990 = vld [vmem:[%s3 + $0x2e0] sm:$0xff]
    %v991 = vld [vmem:[%s3 + $0x2e8] sm:$0xff]
    %v992 = vld [vmem:[%s3 + $0x2f0] sm:$0xff]
    %v993 = vld [vmem:[%s3 + $0x2f8] sm:$0xff]
    %v994 = vld [vmem:[%s3 + $0x300] sm:$0xff]
    %v995 = vld [vmem:[%s3 + $0x308] sm:$0xff]
    %v996 = vld [vmem:[%s3 + $0x310] sm:$0xff]
    %v997 = vld [vmem:[%s3 + $0x318] sm:$0xff]
    %v998 = vld [vmem:[%s3 + $0x320] sm:$0xff]
    %v999 = vld [vmem:[%s3 + $0x328] sm:$0xff]
    %v1000 = vld [vmem:[%s3 + $0x330] sm:$0xff]
    %v1001 = vld [vmem:[%s3 + $0x338] sm:$0xff]
    %v1002 = vld [vmem:[%s3 + $0x340] sm:$0xff]
    %v1003 = vld [vmem:[%s3 + $0x348] sm:$0xff]
    %v1004 = vld [vmem:[%s3 + $0x350] sm:$0xff]
    %v1005 = vld [vmem:[%s3 + $0x358] sm:$0xff]
    %v1006 = vld [vmem:[%s3 + $0x360] sm:$0xff]
    %v1007 = vld [vmem:[%s3 + $0x368] sm:$0xff]
    %v1008 = vld [vmem:[%s3 + $0x370] sm:$0xff]
    %v1009 = vld [vmem:[%s3 + $0x378] sm:$0xff]
    %v1010 = vld [vmem:[%s3 + $0x380] sm:$0xff]
    %v1011 = vld [vmem:[%s3 + $0x388] sm:$0xff]
    %v1012 = vld [vmem:[%s3 + $0x390] sm:$0xff]
    %v1013 = vld [vmem:[%s3 + $0x398] sm:$0xff]
    %v1014 = vld [vmem:[%s3 + $0x3a0] sm:$0xff]
    %v1015 = vld [vmem:[%s3 + $0x3a8] sm:$0xff]
    %v1016 = vld [vmem:[%s3 + $0x3b0] sm:$0xff]
    %v1017 = vld [vmem:[%s3 + $0x3b8] sm:$0xff]
    %v1018 = vld [vmem:[%s3 + $0x3c0] sm:$0xff]
    %v1019 = vld [vmem:[%s3 + $0x3c8] sm:$0xff]
    %v1020 = vld [vmem:[%s3 + $0x3d0] sm:$0xff]
    %v1021 = vld [vmem:[%s3 + $0x3d8] sm:$0xff]
    %v1022 = vld [vmem:[%s3 + $0x3e0] sm:$0xff]
    %v1023 = vld [vmem:[%s3 + $0x3e8] sm:$0xff]
    %v1024 = vld [vmem:[%s3 + $0x3f0] sm:$0xff]
    %v1025 = vld [vmem:[%s3 + $0x3f8] sm:$0xff]
    %v1026 = vld [vmem:[%s3 + $0x400] sm:$0xff]
    %v1027 = vld [vmem:[%s3 + $0x408] sm:$0xff]
    %v1028 = vld [vmem:[%s3 + $0x410] sm:$0xff]
    %v1029 = vld [vmem:[%s3 + $0x418] sm:$0xff]
    %v1030 = vld [vmem:[%s3 + $0x420] sm:$0xff]
    %v1031 = vld [vmem:[%s3 + $0x428] sm:$0xff]
    %v1032 = vld [vmem:[%s3 + $0x430] sm:$0xff]
    %v1033 = vld [vmem:[%s3 + $0x438] sm:$0xff]
    %v1034 = vld [vmem:[%s3 + $0x440] sm:$0xff]
    %v1035 = vld [vmem:[%s3 + $0x448] sm:$0xff]
    %v1036 = vld [vmem:[%s3 + $0x450] sm:$0xff]
    %v1037 = vld [vmem:[%s3 + $0x458] sm:$0xff]
    %v1038 = vld [vmem:[%s3 + $0x460] sm:$0xff]
    %v1039 = vld [vmem:[%s3 + $0x468] sm:$0xff]
    %v1040 = vld [vmem:[%s3 + $0x470] sm:$0xff]
    %v1041 = vld [vmem:[%s3 + $0x478] sm:$0xff]
    %v1042 = vld [vmem:[%s3 + $0x480] sm:$0xff]
    %v1043 = vld [vmem:[%s3 + $0x488] sm:$0xff]
    %v1044 = vld [vmem:[%s3 + $0x490] sm:$0xff]
    %v1045 = vld [vmem:[%s3 + $0x498] sm:$0xff]
    %v1046 = vld [vmem:[%s3 + $0x4a0] sm:$0xff]
    %v1047 = vld [vmem:[%s3 + $0x4a8] sm:$0xff]
    %v1048 = vld [vmem:[%s3 + $0x4b0] sm:$0xff]
    %v1049 = vld [vmem:[%s3 + $0x4b8] sm:$0xff]
    %v1050 = vld [vmem:[%s3 + $0x4c0] sm:$0xff]
    %v1051 = vld [vmem:[%s3 + $0x4c8] sm:$0xff]
    %v1052 = vld [vmem:[%s3 + $0x4d0] sm:$0xff]
    %v1053 = vld [vmem:[%s3 + $0x4d8] sm:$0xff]
    %v1054 = vld [vmem:[%s3 + $0x4e0] sm:$0xff]
    %v1055 = vld [vmem:[%s3 + $0x4e8] sm:$0xff]
    %v1056 = vld [vmem:[%s3 + $0x4f0] sm:$0xff]
    %v1057 = vld [vmem:[%s3 + $0x4f8] sm:$0xff]
    %v1058 = vld [vmem:[%s3 + $0x500] sm:$0xff]
    %v1059 = vld [vmem:[%s3 + $0x508] sm:$0xff]
    %v1060 = vld [vmem:[%s3 + $0x510] sm:$0xff]
    %v1061 = vld [vmem:[%s3 + $0x518] sm:$0xff]
    %v1062 = vld [vmem:[%s3 + $0x520] sm:$0xff]
    %v1063 = vld [vmem:[%s3 + $0x528] sm:$0xff]
    %v1064 = vld [vmem:[%s3 + $0x530] sm:$0xff]
    %v1065 = vld [vmem:[%s3 + $0x538] sm:$0xff]
    %v1066 = vld [vmem:[%s3 + $0x540] sm:$0xff]
    %v1067 = vld [vmem:[%s3 + $0x548] sm:$0xff]
    %v1068 = vld [vmem:[%s3 + $0x550] sm:$0xff]
    %v1069 = vld [vmem:[%s3 + $0x558] sm:$0xff]
    %v1070 = vld [vmem:[%s3 + $0x560] sm:$0xff]
    %v1071 = vld [vmem:[%s3 + $0x568] sm:$0xff]
    %v1072 = vld [vmem:[%s3 + $0x570] sm:$0xff]
    %v1073 = vld [vmem:[%s3 + $0x578] sm:$0xff]
    %v1074 = vld [vmem:[%s3 + $0x580] sm:$0xff]
    %v1075 = vld [vmem:[%s3 + $0x588] sm:$0xff]
    %v1076 = vld [vmem:[%s3 + $0x590] sm:$0xff]
    %v1077 = vld [vmem:[%s3 + $0x598] sm:$0xff]
    %v1078 = vld [vmem:[%s3 + $0x5a0] sm:$0xff]
    %v1079 = vld [vmem:[%s3 + $0x5a8] sm:$0xff]
    %v1080 = vld [vmem:[%s3 + $0x5b0] sm:$0xff]
    %v1081 = vld [vmem:[%s3 + $0x5b8] sm:$0xff]
    %v1082 = vld [vmem:[%s3 + $0x5c0] sm:$0xff]
    %v1083 = vld [vmem:[%s3 + $0x5c8] sm:$0xff]
    %v1084 = vld [vmem:[%s3 + $0x5d0] sm:$0xff]
    %v1085 = vld [vmem:[%s3 + $0x5d8] sm:$0xff]
    %v1086 = vld [vmem:[%s3 + $0x5e0] sm:$0xff]
    %v1087 = vld [vmem:[%s3 + $0x5e8] sm:$0xff]
    %v1088 = vld [vmem:[%s3 + $0x5f0] sm:$0xff]
    %v1089 = vld [vmem:[%s3 + $0x5f8] sm:$0xff]
    %v1090 = vld [vmem:[%s3 + $0x600] sm:$0xff]
    %v1091 = vld [vmem:[%s3 + $0x608] sm:$0xff]
    %v1092 = vld [vmem:[%s3 + $0x610] sm:$0xff]
    %v1093 = vld [vmem:[%s3 + $0x618] sm:$0xff]
    %v1094 = vld [vmem:[%s3 + $0x620] sm:$0xff]
    %v1095 = vld [vmem:[%s3 + $0x628] sm:$0xff]
    %v1096 = vld [vmem:[%s3 + $0x630] sm:$0xff]
    %v1097 = vld [vmem:[%s3 + $0x638] sm:$0xff]
    %v1098 = vld [vmem:[%s3 + $0x640] sm:$0xff]
    %v1099 = vld [vmem:[%s3 + $0x648] sm:$0xff]
    %v1100 = vld [vmem:[%s3 + $0x650] sm:$0xff]
    %v1101 = vld [vmem:[%s3 + $0x658] sm:$0xff]
    %v1102 = vld [vmem:[%s3 + $0x660] sm:$0xff]
    %v1103 = vld [vmem:[%s3 + $0x668] sm:$0xff]
    %v1104 = vld [vmem:[%s3 + $0x670] sm:$0xff]
    %v1105 = vld [vmem:[%s3 + $0x678] sm:$0xff]
    %v1106 = vld [vmem:[%s3 + $0x680] sm:$0xff]
    %v1107 = vld [vmem:[%s3 + $0x688] sm:$0xff]
    %v1108 = vld [vmem:[%s3 + $0x690] sm:$0xff]
    %v1109 = vld [vmem:[%s3 + $0x698] sm:$0xff]
    %v1110 = vld [vmem:[%s3 + $0x6a0] sm:$0xff]
    %v1111 = vld [vmem:[%s3 + $0x6a8] sm:$0xff]
    %v1112 = vld [vmem:[%s3 + $0x6b0] sm:$0xff]
    %v1113 = vld [vmem:[%s3 + $0x6b8] sm:$0xff]
    %v1114 = vld [vmem:[%s3 + $0x6c0] sm:$0xff]
    %v1115 = vld [vmem:[%s3 + $0x6c8] sm:$0xff]
    %v1116 = vld [vmem:[%s3 + $0x6d0] sm:$0xff]
    %v1117 = vld [vmem:[%s3 + $0x6d8] sm:$0xff]
    %v1118 = vld [vmem:[%s3 + $0x6e0] sm:$0xff]
    %v1119 = vld [vmem:[%s3 + $0x6e8] sm:$0xff]
    %v1120 = vld [vmem:[%s3 + $0x6f0] sm:$0xff]
    %v1121 = vld [vmem:[%s3 + $0x6f8] sm:$0xff]
    %v1122 = vld [vmem:[%s3 + $0x700] sm:$0xff]
    %v1123 = vld [vmem:[%s3 + $0x708] sm:$0xff]
    %v1124 = vld [vmem:[%s3 + $0x710] sm:$0xff]
    %v1125 = vld [vmem:[%s3 + $0x718] sm:$0xff]
    %v1126 = vld [vmem:[%s3 + $0x720] sm:$0xff]
    %v1127 = vld [vmem:[%s3 + $0x728] sm:$0xff]
    %v1128 = vld [vmem:[%s3 + $0x730] sm:$0xff]
    %v1129 = vld [vmem:[%s3 + $0x738] sm:$0xff]
    %v1130 = vld [vmem:[%s3 + $0x740] sm:$0xff]
    %v1131 = vld [vmem:[%s3 + $0x748] sm:$0xff]
    %v1132 = vld [vmem:[%s3 + $0x750] sm:$0xff]
    %v1133 = vld [vmem:[%s3 + $0x758] sm:$0xff]
    %v1134 = vld [vmem:[%s3 + $0x760] sm:$0xff]
    %v1135 = vld [vmem:[%s3 + $0x768] sm:$0xff]
    %v1136 = vld [vmem:[%s3 + $0x770] sm:$0xff]
    %v1137 = vld [vmem:[%s3 + $0x778] sm:$0xff]
    %v1138 = vld [vmem:[%s3 + $0x780] sm:$0xff]
    %v1139 = vld [vmem:[%s3 + $0x788] sm:$0xff]
    %v1140 = vld [vmem:[%s3 + $0x790] sm:$0xff]
    %v1141 = vld [vmem:[%s3 + $0x798] sm:$0xff]
    %v1142 = vld [vmem:[%s3 + $0x7a0] sm:$0xff]
    %v1143 = vld [vmem:[%s3 + $0x7a8] sm:$0xff]
    %v1144 = vld [vmem:[%s3 + $0x7b0] sm:$0xff]
    %v1145 = vld [vmem:[%s3 + $0x7b8] sm:$0xff]
    %v1146 = vld [vmem:[%s3 + $0x7c0] sm:$0xff]
    %v1147 = vld [vmem:[%s3 + $0x7c8] sm:$0xff]
    %v1148 = vld [vmem:[%s3 + $0x7d0] sm:$0xff]
    %v1149 = vld [vmem:[%s3 + $0x7d8] sm:$0xff]
    %v1150 = vld [vmem:[%s3 + $0x7e0] sm:$0xff]
    %v1151 = vld [vmem:[%s3 + $0x7e8] sm:$0xff]
    %v1152 = vld [vmem:[%s3 + $0x7f0] sm:$0xff]
    %v1153 = vld [vmem:[%s3 + $0x7f8] sm:$0xff]
    %v1154 = vld [vmem:[%s3 + $0x800] sm:$0xff]
    %v1155 = vld [vmem:[%s3 + $0x808] sm:$0xff]
    %v1156 = vld [vmem:[%s3 + $0x810] sm:$0xff]
    %v1157 = vld [vmem:[%s3 + $0x818] sm:$0xff]
    %v1158 = vld [vmem:[%s3 + $0x820] sm:$0xff]
    %v1159 = vld [vmem:[%s3 + $0x828] sm:$0xff]
    %v1160 = vld [vmem:[%s3 + $0x830] sm:$0xff]
    %v1161 = vld [vmem:[%s3 + $0x838] sm:$0xff]
    %v1162 = vld [vmem:[%s3 + $0x840] sm:$0xff]
    %v1163 = vld [vmem:[%s3 + $0x848] sm:$0xff]
    %v1164 = vld [vmem:[%s3 + $0x850] sm:$0xff]
    %v1165 = vld [vmem:[%s3 + $0x858] sm:$0xff]
    %v1166 = vld [vmem:[%s3 + $0x860] sm:$0xff]
    %v1167 = vld [vmem:[%s3 + $0x868] sm:$0xff]
    %v1168 = vld [vmem:[%s3 + $0x870] sm:$0xff]
    %v1169 = vld [vmem:[%s3 + $0x878] sm:$0xff]
    %v1170 = vld [vmem:[%s3 + $0x880] sm:$0xff]
    %v1171 = vld [vmem:[%s3 + $0x888] sm:$0xff]
    %v1172 = vld [vmem:[%s3 + $0x890] sm:$0xff]
    %v1173 = vld [vmem:[%s3 + $0x898] sm:$0xff]
    %v1174 = vld [vmem:[%s3 + $0x8a0] sm:$0xff]
    %v1175 = vld [vmem:[%s3 + $0x8a8] sm:$0xff]
    %v1176 = vld [vmem:[%s3 + $0x8b0] sm:$0xff]
    %v1177 = vld [vmem:[%s3 + $0x8b8] sm:$0xff]
    %v1178 = vld [vmem:[%s3 + $0x8c0] sm:$0xff]
    %v1179 = vld [vmem:[%s3 + $0x8c8] sm:$0xff]
    %v1180 = vld [vmem:[%s3 + $0x8d0] sm:$0xff]
    %v1181 = vld [vmem:[%s3 + $0x8d8] sm:$0xff]
    %v1182 = vld [vmem:[%s3 + $0x8e0] sm:$0xff]
    %v1183 = vld [vmem:[%s3 + $0x8e8] sm:$0xff]
    %v1184 = vld [vmem:[%s3 + $0x8f0] sm:$0xff]
    %v1185 = vld [vmem:[%s3 + $0x8f8] sm:$0xff]
    %v1186 = vld [vmem:[%s3 + $0x900] sm:$0xff]
    %v1187 = vld [vmem:[%s3 + $0x908] sm:$0xff]
    %v1188 = vld [vmem:[%s3 + $0x910] sm:$0xff]
    %v1189 = vld [vmem:[%s3 + $0x918] sm:$0xff]
    %v1190 = vld [vmem:[%s3 + $0x920] sm:$0xff]
    %v1191 = vld [vmem:[%s3 + $0x928] sm:$0xff]
    %v1192 = vld [vmem:[%s3 + $0x930] sm:$0xff]
    %v1193 = vld [vmem:[%s3 + $0x938] sm:$0xff]
    %v1194 = vld [vmem:[%s3 + $0x940] sm:$0xff]
    %v1195 = vld [vmem:[%s3 + $0x948] sm:$0xff]
    %v1196 = vld [vmem:[%s3 + $0x950] sm:$0xff]
    %v1197 = vld [vmem:[%s3 + $0x958] sm:$0xff]
    %v1198 = vld [vmem:[%s3 + $0x960] sm:$0xff]
    %v1199 = vld [vmem:[%s3 + $0x968] sm:$0xff]
    %v1200 = vld [vmem:[%s3 + $0x970] sm:$0xff]
    %v1201 = vld [vmem:[%s3 + $0x978] sm:$0xff]
    %v1202 = vld [vmem:[%s3 + $0x980] sm:$0xff]
    %v1203 = vld [vmem:[%s3 + $0x988] sm:$0xff]
    %v1204 = vld [vmem:[%s3 + $0x990] sm:$0xff]
    %v1205 = vld [vmem:[%s3 + $0x998] sm:$0xff]
    %v1206 = vld [vmem:[%s3 + $0x9a0] sm:$0xff]
    %v1207 = vld [vmem:[%s3 + $0x9a8] sm:$0xff]
    %v1208 = vld [vmem:[%s3 + $0x9b0] sm:$0xff]
    %v1209 = vld [vmem:[%s3 + $0x9b8] sm:$0xff]
    %v1210 = vld [vmem:[%s3 + $0x9c0] sm:$0xff]
    %v1211 = vld [vmem:[%s3 + $0x9c8] sm:$0xff]
    %v1212 = vld [vmem:[%s3 + $0x9d0] sm:$0xff]
    %v1213 = vld [vmem:[%s3 + $0x9d8] sm:$0xff]
    %v1214 = vld [vmem:[%s3 + $0x9e0] sm:$0xff]
    %v1215 = vld [vmem:[%s3 + $0x9e8] sm:$0xff]
    %v1216 = vld [vmem:[%s3 + $0x9f0] sm:$0xff]
    %v1217 = vld [vmem:[%s3 + $0x9f8] sm:$0xff]
    %v1218 = vld [vmem:[%s3 + $0xa00] sm:$0xff]
    %v1219 = vld [vmem:[%s3 + $0xa08] sm:$0xff]
    %v1220 = vld [vmem:[%s3 + $0xa10] sm:$0xff]
    %v1221 = vld [vmem:[%s3 + $0xa18] sm:$0xff]
    %v1222 = vld [vmem:[%s3 + $0xa20] sm:$0xff]
    %v1223 = vld [vmem:[%s3 + $0xa28] sm:$0xff]
    %v1224 = vld [vmem:[%s3 + $0xa30] sm:$0xff]
    %v1225 = vld [vmem:[%s3 + $0xa38] sm:$0xff]
    %v1226 = vld [vmem:[%s3 + $0xa40] sm:$0xff]
    %v1227 = vld [vmem:[%s3 + $0xa48] sm:$0xff]
    %v1228 = vld [vmem:[%s3 + $0xa50] sm:$0xff]
    %v1229 = vld [vmem:[%s3 + $0xa58] sm:$0xff]
    %v1230 = vld [vmem:[%s3 + $0xa60] sm:$0xff]
    %v1231 = vld [vmem:[%s3 + $0xa68] sm:$0xff]
    %v1232 = vld [vmem:[%s3 + $0xa70] sm:$0xff]
    %v1233 = vld [vmem:[%s3 + $0xa78] sm:$0xff]
    %v1234 = vld [vmem:[%s3 + $0xa80] sm:$0xff]
    %v1235 = vld [vmem:[%s3 + $0xa88] sm:$0xff]
    %v1236 = vld [vmem:[%s3 + $0xa90] sm:$0xff]
    %v1237 = vld [vmem:[%s3 + $0xa98] sm:$0xff]
    %v1238 = vld [vmem:[%s3 + $0xaa0] sm:$0xff]
    %v1239 = vld [vmem:[%s3 + $0xaa8] sm:$0xff]
    %v1240 = vld [vmem:[%s3 + $0xab0] sm:$0xff]
    %v1241 = vld [vmem:[%s3 + $0xab8] sm:$0xff]
    %v1242 = vld [vmem:[%s3 + $0xac0] sm:$0xff]
    %v1243 = vld [vmem:[%s3 + $0xac8] sm:$0xff]
    %v1244 = vld [vmem:[%s3 + $0xad0] sm:$0xff]
    %v1245 = vld [vmem:[%s3 + $0xad8] sm:$0xff]
    %v1246 = vld [vmem:[%s3 + $0xae0] sm:$0xff]
    %v1247 = vld [vmem:[%s3 + $0xae8] sm:$0xff]
    %v1248 = vld [vmem:[%s3 + $0xaf0] sm:$0xff]
    %v1249 = vld [vmem:[%s3 + $0xaf8] sm:$0xff]
    %v1250 = vld [vmem:[%s3 + $0xb00] sm:$0xff]
    %v1251 = vld [vmem:[%s3 + $0xb08] sm:$0xff]
    %v1252 = vld [vmem:[%s3 + $0xb10] sm:$0xff]
    %v1253 = vld [vmem:[%s3 + $0xb18] sm:$0xff]
    %v1254 = vld [vmem:[%s3 + $0xb20] sm:$0xff]
    %v1255 = vld [vmem:[%s3 + $0xb28] sm:$0xff]
    %v1256 = vld [vmem:[%s3 + $0xb30] sm:$0xff]
    %v1257 = vld [vmem:[%s3 + $0xb38] sm:$0xff]
    %v1258 = vld [vmem:[%s3 + $0xb40] sm:$0xff]
    %v1259 = vld [vmem:[%s3 + $0xb48] sm:$0xff]
    %v1260 = vld [vmem:[%s3 + $0xb50] sm:$0xff]
    %v1261 = vld [vmem:[%s3 + $0xb58] sm:$0xff]
    %v1262 = vld [vmem:[%s3 + $0xb60] sm:$0xff]
    %v1263 = vld [vmem:[%s3 + $0xb68] sm:$0xff]
    %v1264 = vld [vmem:[%s3 + $0xb70] sm:$0xff]
    %v1265 = vld [vmem:[%s3 + $0xb78] sm:$0xff]
    %v1266 = vld [vmem:[%s3 + $0xb80] sm:$0xff]
    %v1267 = vld [vmem:[%s3 + $0xb88] sm:$0xff]
    %v1268 = vld [vmem:[%s3 + $0xb90] sm:$0xff]
    %v1269 = vld [vmem:[%s3 + $0xb98] sm:$0xff]
    %v1270 = vld [vmem:[%s3 + $0xba0] sm:$0xff]
    %v1271 = vld [vmem:[%s3 + $0xba8] sm:$0xff]
    %v1272 = vld [vmem:[%s3 + $0xbb0] sm:$0xff]
    %v1273 = vld [vmem:[%s3 + $0xbb8] sm:$0xff]
    %v1274 = vld [vmem:[%s3 + $0xbc0] sm:$0xff]
    %v1275 = vld [vmem:[%s3 + $0xbc8] sm:$0xff]
    %v1276 = vld [vmem:[%s3 + $0xbd0] sm:$0xff]
    %v1277 = vld [vmem:[%s3 + $0xbd8] sm:$0xff]
    %v1278 = vld [vmem:[%s3 + $0xbe0] sm:$0xff]
    %v1279 = vld [vmem:[%s3 + $0xbe8] sm:$0xff]
    %v1280 = vld [vmem:[%s3 + $0xbf0] sm:$0xff]
    %v1281 = vld [vmem:[%s3 + $0xbf8] sm:$0xff]
    %v1282 = vld [vmem:[%s3 + $0xc00] sm:$0xff]
    %v1283 = vld [vmem:[%s3 + $0xc08] sm:$0xff]
    %v1284 = vld [vmem:[%s3 + $0xc10] sm:$0xff]
    %v1285 = vld [vmem:[%s3 + $0xc18] sm:$0xff]
    %v1286 = vld [vmem:[%s3 + $0xc20] sm:$0xff]
    %v1287 = vld [vmem:[%s3 + $0xc28] sm:$0xff]
    %v1288 = vld [vmem:[%s3 + $0xc30] sm:$0xff]
    %v1289 = vld [vmem:[%s3 + $0xc38] sm:$0xff]
    %v1290 = vld [vmem:[%s3 + $0xc40] sm:$0xff]
    %v1291 = vld [vmem:[%s3 + $0xc48] sm:$0xff]
    %v1292 = vld [vmem:[%s3 + $0xc50] sm:$0xff]
    %v1293 = vld [vmem:[%s3 + $0xc58] sm:$0xff]
    %v1294 = vld [vmem:[%s3 + $0xc60] sm:$0xff]
    %v1295 = vld [vmem:[%s3 + $0xc68] sm:$0xff]
    %v1296 = vld [vmem:[%s3 + $0xc70] sm:$0xff]
    %v1297 = vld [vmem:[%s3 + $0xc78] sm:$0xff]
    %v1298 = vld [vmem:[%s3 + $0xc80] sm:$0xff]
    %v1299 = vld [vmem:[%s3 + $0xc88] sm:$0xff]
    %v1300 = vld [vmem:[%s3 + $0xc90] sm:$0xff]
    %v1301 = vld [vmem:[%s3 + $0xc98] sm:$0xff]
    %v1302 = vld [vmem:[%s3 + $0xca0] sm:$0xff]
    %v1303 = vld [vmem:[%s3 + $0xca8] sm:$0xff]
    %v1304 = vld [vmem:[%s3 + $0xcb0] sm:$0xff]
    %v1305 = vld [vmem:[%s3 + $0xcb8] sm:$0xff]
    %v1306 = vld [vmem:[%s3 + $0xcc0] sm:$0xff]
    %v1307 = vld [vmem:[%s3 + $0xcc8] sm:$0xff]
    %v1308 = vld [vmem:[%s3 + $0xcd0] sm:$0xff]
    %v1309 = vld [vmem:[%s3 + $0xcd8] sm:$0xff]
    %v1310 = vld [vmem:[%s3 + $0xce0] sm:$0xff]
    %v1311 = vld [vmem:[%s3 + $0xce8] sm:$0xff]
    %v1312 = vld [vmem:[%s3 + $0xcf0] sm:$0xff]
    %v1313 = vld [vmem:[%s3 + $0xcf8] sm:$0xff]
    %v1314 = vld [vmem:[%s3 + $0xd00] sm:$0xff]
    %v1315 = vld [vmem:[%s3 + $0xd08] sm:$0xff]
    %v1316 = vld [vmem:[%s3 + $0xd10] sm:$0xff]
    %v1317 = vld [vmem:[%s3 + $0xd18] sm:$0xff]
    %v1318 = vld [vmem:[%s3 + $0xd20] sm:$0xff]
    %v1319 = vld [vmem:[%s3 + $0xd28] sm:$0xff]
    %v1320 = vld [vmem:[%s3 + $0xd30] sm:$0xff]
    %v1321 = vld [vmem:[%s3 + $0xd38] sm:$0xff]
    %v1322 = vld [vmem:[%s3 + $0xd40] sm:$0xff]
    %v1323 = vld [vmem:[%s3 + $0xd48] sm:$0xff]
    %v1324 = vld [vmem:[%s3 + $0xd50] sm:$0xff]
    %v1325 = vld [vmem:[%s3 + $0xd58] sm:$0xff]
    %v1326 = vld [vmem:[%s3 + $0xd60] sm:$0xff]
    %v1327 = vld [vmem:[%s3 + $0xd68] sm:$0xff]
    %v1328 = vld [vmem:[%s3 + $0xd70] sm:$0xff]
    %v1329 = vld [vmem:[%s3 + $0xd78] sm:$0xff]
    %v1330 = vld [vmem:[%s3 + $0xd80] sm:$0xff]
    %v1331 = vld [vmem:[%s3 + $0xd88] sm:$0xff]
    %v1332 = vld [vmem:[%s3 + $0xd90] sm:$0xff]
    %v1333 = vld [vmem:[%s3 + $0xd98] sm:$0xff]
    %v1334 = vld [vmem:[%s3 + $0xda0] sm:$0xff]
    %v1335 = vld [vmem:[%s3 + $0xda8] sm:$0xff]
    %v1336 = vld [vmem:[%s3 + $0xdb0] sm:$0xff]
    %v1337 = vld [vmem:[%s3 + $0xdb8] sm:$0xff]
    %v1338 = vld [vmem:[%s3 + $0xdc0] sm:$0xff]
    %v1339 = vld [vmem:[%s3 + $0xdc8] sm:$0xff]
    %v1340 = vld [vmem:[%s3 + $0xdd0] sm:$0xff]
    %v1341 = vld [vmem:[%s3 + $0xdd8] sm:$0xff]
    %v1342 = vld [vmem:[%s3 + $0xde0] sm:$0xff]
    %v1343 = vld [vmem:[%s3 + $0xde8] sm:$0xff]
    %v1344 = vld [vmem:[%s3 + $0xdf0] sm:$0xff]
    %v1345 = vld [vmem:[%s3 + $0xdf8] sm:$0xff]
    %v1346 = vld [vmem:[%s3 + $0xe00] sm:$0xff]
    %v1347 = vld [vmem:[%s3 + $0xe08] sm:$0xff]
    %v1348 = vld [vmem:[%s3 + $0xe10] sm:$0xff]
    %v1349 = vld [vmem:[%s3 + $0xe18] sm:$0xff]
    %v1350 = vld [vmem:[%s3 + $0xe20] sm:$0xff]
    %v1351 = vld [vmem:[%s3 + $0xe28] sm:$0xff]
    %v1352 = vld [vmem:[%s3 + $0xe30] sm:$0xff]
    %v1353 = vld [vmem:[%s3 + $0xe38] sm:$0xff]
    %v1354 = vld [vmem:[%s3 + $0xe40] sm:$0xff]
    %v1355 = vld [vmem:[%s3 + $0xe48] sm:$0xff]
    %v1356 = vld [vmem:[%s3 + $0xe50] sm:$0xff]
    %v1357 = vld [vmem:[%s3 + $0xe58] sm:$0xff]
    %v1358 = vld [vmem:[%s3 + $0xe60] sm:$0xff]
    %v1359 = vld [vmem:[%s3 + $0xe68] sm:$0xff]
    %v1360 = vld [vmem:[%s3 + $0xe70] sm:$0xff]
    %v1361 = vld [vmem:[%s3 + $0xe78] sm:$0xff]
    %v1362 = vld [vmem:[%s3 + $0xe80] sm:$0xff]
    %v1363 = vld [vmem:[%s3 + $0xe88] sm:$0xff]
    %v1364 = vld [vmem:[%s3 + $0xe90] sm:$0xff]
    %v1365 = vld [vmem:[%s3 + $0xe98] sm:$0xff]
    %v1366 = vld [vmem:[%s3 + $0xea0] sm:$0xff]
    %v1367 = vld [vmem:[%s3 + $0xea8] sm:$0xff]
    %v1368 = vld [vmem:[%s3 + $0xeb0] sm:$0xff]
    %v1369 = vld [vmem:[%s3 + $0xeb8] sm:$0xff]
    %v1370 = vld [vmem:[%s3 + $0xec0] sm:$0xff]
    %v1371 = vld [vmem:[%s3 + $0xec8] sm:$0xff]
    %v1372 = vld [vmem:[%s3 + $0xed0] sm:$0xff]
    %v1373 = vld [vmem:[%s3 + $0xed8] sm:$0xff]
    %v1374 = vld [vmem:[%s3 + $0xee0] sm:$0xff]
    %v1375 = vld [vmem:[%s3 + $0xee8] sm:$0xff]
    %v1376 = vld [vmem:[%s3 + $0xef0] sm:$0xff]
    %v1377 = vld [vmem:[%s3 + $0xef8] sm:$0xff]
    %v1378 = vld [vmem:[%s3 + $0xf00] sm:$0xff]
    %v1379 = vld [vmem:[%s3 + $0xf08] sm:$0xff]
    %v1380 = vld [vmem:[%s3 + $0xf10] sm:$0xff]
    %v1381 = vld [vmem:[%s3 + $0xf18] sm:$0xff]
    %v1382 = vld [vmem:[%s3 + $0xf20] sm:$0xff]
    %v1383 = vld [vmem:[%s3 + $0xf28] sm:$0xff]
    %v1384 = vld [vmem:[%s3 + $0xf30] sm:$0xff]
    %v1385 = vld [vmem:[%s3 + $0xf38] sm:$0xff]
    %v1386 = vld [vmem:[%s3 + $0xf40] sm:$0xff]
    %v1387 = vld [vmem:[%s3 + $0xf48] sm:$0xff]
    %v1388 = vld [vmem:[%s3 + $0xf50] sm:$0xff]
    %v1389 = vld [vmem:[%s3 + $0xf58] sm:$0xff]
    %v1390 = vld [vmem:[%s3 + $0xf60] sm:$0xff]
    %v1391 = vld [vmem:[%s3 + $0xf68] sm:$0xff]
    %v1392 = vld [vmem:[%s3 + $0xf70] sm:$0xff]
    %v1393 = vld [vmem:[%s3 + $0xf78] sm:$0xff]
    %v1394 = vld [vmem:[%s3 + $0xf80] sm:$0xff]
    %v1395 = vld [vmem:[%s3 + $0xf88] sm:$0xff]
    %v1396 = vld [vmem:[%s3 + $0xf90] sm:$0xff]
    %v1397 = vld [vmem:[%s3 + $0xf98] sm:$0xff]
    %v1398 = vld [vmem:[%s3 + $0xfa0] sm:$0xff]
    %v1399 = vld [vmem:[%s3 + $0xfa8] sm:$0xff]
    %v1400 = vld [vmem:[%s3 + $0xfb0] sm:$0xff]
    %v1401 = vld [vmem:[%s3 + $0xfb8] sm:$0xff]
    %v1402 = vld [vmem:[%s3 + $0xfc0] sm:$0xff]
    %v1403 = vld [vmem:[%s3 + $0xfc8] sm:$0xff]
    %v1404 = vld [vmem:[%s3 + $0xfd0] sm:$0xff]
    %v1405 = vld [vmem:[%s3 + $0xfd8] sm:$0xff]
    %v1406 = vld [vmem:[%s3 + $0xfe0] sm:$0xff]
    %v1407 = vld [vmem:[%s3 + $0xfe8] sm:$0xff]
    %v1408 = vld [vmem:[%s3 + $0xff0] sm:$0xff]
    %v1409 = vld [vmem:[%s3 + $0xff8] sm:$0xff]
    %v1410 = vld [vmem:[%s4] sm:$0x1]
    %v1412 = vperm.slane %v1410, 0
    %1414 = vmatpush.msra.mxu0 %v913
    %1415 = vmatpush.msra.mxu0 %v912
    %1416 = vmatpush.msra.mxu0 %v911
    %1417 = vmatpush.msra.mxu0 %v910
    %1418 = vmatpush.msra.mxu0 %v909
    %1419 = vmatpush.msra.mxu0 %v908
    %1420 = vmatpush.msra.mxu0 %v907
    %1421 = vmatpush.msra.mxu0 %v906
    %1422 = vmatpush.msra.mxu0 %v905
    %1423 = vmatpush.msra.mxu0 %v904
    %1424 = vmatpush.msra.mxu0 %v903
    %1425 = vmatpush.msra.mxu0 %v902
    %1426 = vmatpush.msra.mxu0 %v901
    %1427 = vmatpush.msra.mxu0 %v900
    %1428 = vmatpush.msra.mxu0 %v899
    %1429 = vmatpush.msra.mxu0 %v898
    %1430 = vmatmul.f32.gmra.mxu0 %v866
    %v1431 = vpop.f32.mrf.mxu0
    %v1432 = vadd.f32 %v1412, %v1431
    %1433 = vdwg.mxu0
    %1434 = vmatpush.msra.mxu0 %v929
    %1435 = vmatpush.msra.mxu0 %v928
    %1436 = vmatpush.msra.mxu0 %v927
    %1437 = vmatpush.msra.mxu0 %v926
    %1438 = vmatpush.msra.mxu0 %v925
    %1439 = vmatpush.msra.mxu0 %v924
    %1440 = vmatpush.msra.mxu0 %v923
    %1441 = vmatpush.msra.mxu0 %v922
    %1442 = vmatpush.msra.mxu0 %v921
    %1443 = vmatpush.msra.mxu0 %v920
    %1444 = vmatpush.msra.mxu0 %v919
    %1445 = vmatpush.msra.mxu0 %v918
    %1446 = vmatpush.msra.mxu0 %v917
    %1447 = vmatpush.msra.mxu0 %v916
    %1448 = vmatpush.msra.mxu0 %v915
    %1449 = vmatpush.msra.mxu0 %v914
    %1450 = vmatmul.f32.gmra.mxu0 %v867
    %v1451 = vpop.f32.mrf.mxu0
    %v1452 = vadd.f32 %v1432, %v1451
    %1453 = vdwg.mxu0
    %1454 = vmatpush.msra.mxu0 %v945
    %1455 = vmatpush.msra.mxu0 %v944
    %1456 = vmatpush.msra.mxu0 %v943
    %1457 = vmatpush.msra.mxu0 %v942
    %1458 = vmatpush.msra.mxu0 %v941
    %1459 = vmatpush.msra.mxu0 %v940
    %1460 = vmatpush.msra.mxu0 %v939
    %1461 = vmatpush.msra.mxu0 %v938
    %1462 = vmatpush.msra.mxu0 %v937
    %1463 = vmatpush.msra.mxu0 %v936
    %1464 = vmatpush.msra.mxu0 %v935
    %1465 = vmatpush.msra.mxu0 %v934
    %1466 = vmatpush.msra.mxu0 %v933
    %1467 = vmatpush.msra.mxu0 %v932
    %1468 = vmatpush.msra.mxu0 %v931
    %1469 = vmatpush.msra.mxu0 %v930
    %1470 = vmatmul.f32.gmra.mxu0 %v868
    %v1471 = vpop.f32.mrf.mxu0
    %v1472 = vadd.f32 %v1452, %v1471
    %1473 = vdwg.mxu0
    %1474 = vmatpush.msra.mxu0 %v961
    %1475 = vmatpush.msra.mxu0 %v960
    %1476 = vmatpush.msra.mxu0 %v959
    %1477 = vmatpush.msra.mxu0 %v958
    %1478 = vmatpush.msra.mxu0 %v957
    %1479 = vmatpush.msra.mxu0 %v956
    %1480 = vmatpush.msra.mxu0 %v955
    %1481 = vmatpush.msra.mxu0 %v954
    %1482 = vmatpush.msra.mxu0 %v953
    %1483 = vmatpush.msra.mxu0 %v952
    %1484 = vmatpush.msra.mxu0 %v951
    %1485 = vmatpush.msra.mxu0 %v950
    %1486 = vmatpush.msra.mxu0 %v949
    %1487 = vmatpush.msra.mxu0 %v948
    %1488 = vmatpush.msra.mxu0 %v947
    %1489 = vmatpush.msra.mxu0 %v946
    %1490 = vmatmul.f32.gmra.mxu0 %v869
    %v1491 = vpop.f32.mrf.mxu0
    %v1492 = vadd.f32 %v1472, %v1491
    %1493 = vdwg.mxu0
    %1494 = vmatpush.msra.mxu0 %v977
    %1495 = vmatpush.msra.mxu0 %v976
    %1496 = vmatpush.msra.mxu0 %v975
    %1497 = vmatpush.msra.mxu0 %v974
    %1498 = vmatpush.msra.mxu0 %v973
    %1499 = vmatpush.msra.mxu0 %v972
    %1500 = vmatpush.msra.mxu0 %v971
    %1501 = vmatpush.msra.mxu0 %v970
    %1502 = vmatpush.msra.mxu0 %v969
    %1503 = vmatpush.msra.mxu0 %v968
    %1504 = vmatpush.msra.mxu0 %v967
    %1505 = vmatpush.msra.mxu0 %v966
    %1506 = vmatpush.msra.mxu0 %v965
    %1507 = vmatpush.msra.mxu0 %v964
    %1508 = vmatpush.msra.mxu0 %v963
    %1509 = vmatpush.msra.mxu0 %v962
    %1510 = vmatmul.f32.gmra.mxu0 %v870
    %v1511 = vpop.f32.mrf.mxu0
    %v1512 = vadd.f32 %v1492, %v1511
    %1513 = vdwg.mxu0
    %1514 = vmatpush.msra.mxu0 %v993
    %1515 = vmatpush.msra.mxu0 %v992
    %1516 = vmatpush.msra.mxu0 %v991
    %1517 = vmatpush.msra.mxu0 %v990
    %1518 = vmatpush.msra.mxu0 %v989
    %1519 = vmatpush.msra.mxu0 %v988
    %1520 = vmatpush.msra.mxu0 %v987
    %1521 = vmatpush.msra.mxu0 %v986
    %1522 = vmatpush.msra.mxu0 %v985
    %1523 = vmatpush.msra.mxu0 %v984
    %1524 = vmatpush.msra.mxu0 %v983
    %1525 = vmatpush.msra.mxu0 %v982
    %1526 = vmatpush.msra.mxu0 %v981
    %1527 = vmatpush.msra.mxu0 %v980
    %1528 = vmatpush.msra.mxu0 %v979
    %1529 = vmatpush.msra.mxu0 %v978
    %1530 = vmatmul.f32.gmra.mxu0 %v871
    %v1531 = vpop.f32.mrf.mxu0
    %v1532 = vadd.f32 %v1512, %v1531
    %1533 = vdwg.mxu0
    %1534 = vmatpush.msra.mxu0 %v1009
    %1535 = vmatpush.msra.mxu0 %v1008
    %1536 = vmatpush.msra.mxu0 %v1007
    %1537 = vmatpush.msra.mxu0 %v1006
    %1538 = vmatpush.msra.mxu0 %v1005
    %1539 = vmatpush.msra.mxu0 %v1004
    %1540 = vmatpush.msra.mxu0 %v1003
    %1541 = vmatpush.msra.mxu0 %v1002
    %1542 = vmatpush.msra.mxu0 %v1001
    %1543 = vmatpush.msra.mxu0 %v1000
    %1544 = vmatpush.msra.mxu0 %v999
    %1545 = vmatpush.msra.mxu0 %v998
    %1546 = vmatpush.msra.mxu0 %v997
    %1547 = vmatpush.msra.mxu0 %v996
    %1548 = vmatpush.msra.mxu0 %v995
    %1549 = vmatpush.msra.mxu0 %v994
    %1550 = vmatmul.f32.gmra.mxu0 %v872
    %v1551 = vpop.f32.mrf.mxu0
    %v1552 = vadd.f32 %v1532, %v1551
    %1553 = vdwg.mxu0
    %1554 = vmatpush.msra.mxu0 %v1025
    %1555 = vmatpush.msra.mxu0 %v1024
    %1556 = vmatpush.msra.mxu0 %v1023
    %1557 = vmatpush.msra.mxu0 %v1022
    %1558 = vmatpush.msra.mxu0 %v1021
    %1559 = vmatpush.msra.mxu0 %v1020
    %1560 = vmatpush.msra.mxu0 %v1019
    %1561 = vmatpush.msra.mxu0 %v1018
    %1562 = vmatpush.msra.mxu0 %v1017
    %1563 = vmatpush.msra.mxu0 %v1016
    %1564 = vmatpush.msra.mxu0 %v1015
    %1565 = vmatpush.msra.mxu0 %v1014
    %1566 = vmatpush.msra.mxu0 %v1013
    %1567 = vmatpush.msra.mxu0 %v1012
    %1568 = vmatpush.msra.mxu0 %v1011
    %1569 = vmatpush.msra.mxu0 %v1010
    %1570 = vmatmul.f32.gmra.mxu0 %v873
    %v1571 = vpop.f32.mrf.mxu0
    %v1572 = vadd.f32 %v1552, %v1571
    %1573 = vdwg.mxu0
    %1574 = vmatpush.msra.mxu0 %v1041
    %1575 = vmatpush.msra.mxu0 %v1040
    %1576 = vmatpush.msra.mxu0 %v1039
    %1577 = vmatpush.msra.mxu0 %v1038
    %1578 = vmatpush.msra.mxu0 %v1037
    %1579 = vmatpush.msra.mxu0 %v1036
    %1580 = vmatpush.msra.mxu0 %v1035
    %1581 = vmatpush.msra.mxu0 %v1034
    %1582 = vmatpush.msra.mxu0 %v1033
    %1583 = vmatpush.msra.mxu0 %v1032
    %1584 = vmatpush.msra.mxu0 %v1031
    %1585 = vmatpush.msra.mxu0 %v1030
    %1586 = vmatpush.msra.mxu0 %v1029
    %1587 = vmatpush.msra.mxu0 %v1028
    %1588 = vmatpush.msra.mxu0 %v1027
    %1589 = vmatpush.msra.mxu0 %v1026
    %1590 = vmatmul.f32.gmra.mxu0 %v874
    %v1591 = vpop.f32.mrf.mxu0
    %v1592 = vadd.f32 %v1572, %v1591
    %1593 = vdwg.mxu0
    %1594 = vmatpush.msra.mxu0 %v1057
    %1595 = vmatpush.msra.mxu0 %v1056
    %1596 = vmatpush.msra.mxu0 %v1055
    %1597 = vmatpush.msra.mxu0 %v1054
    %1598 = vmatpush.msra.mxu0 %v1053
    %1599 = vmatpush.msra.mxu0 %v1052
    %1600 = vmatpush.msra.mxu0 %v1051
    %1601 = vmatpush.msra.mxu0 %v1050
    %1602 = vmatpush.msra.mxu0 %v1049
    %1603 = vmatpush.msra.mxu0 %v1048
    %1604 = vmatpush.msra.mxu0 %v1047
    %1605 = vmatpush.msra.mxu0 %v1046
    %1606 = vmatpush.msra.mxu0 %v1045
    %1607 = vmatpush.msra.mxu0 %v1044
    %1608 = vmatpush.msra.mxu0 %v1043
    %1609 = vmatpush.msra.mxu0 %v1042
    %1610 = vmatmul.f32.gmra.mxu0 %v875
    %v1611 = vpop.f32.mrf.mxu0
    %v1612 = vadd.f32 %v1592, %v1611
    %1613 = vdwg.mxu0
    %1614 = vmatpush.msra.mxu0 %v1073
    %1615 = vmatpush.msra.mxu0 %v1072
    %1616 = vmatpush.msra.mxu0 %v1071
    %1617 = vmatpush.msra.mxu0 %v1070
    %1618 = vmatpush.msra.mxu0 %v1069
    %1619 = vmatpush.msra.mxu0 %v1068
    %1620 = vmatpush.msra.mxu0 %v1067
    %1621 = vmatpush.msra.mxu0 %v1066
    %1622 = vmatpush.msra.mxu0 %v1065
    %1623 = vmatpush.msra.mxu0 %v1064
    %1624 = vmatpush.msra.mxu0 %v1063
    %1625 = vmatpush.msra.mxu0 %v1062
    %1626 = vmatpush.msra.mxu0 %v1061
    %1627 = vmatpush.msra.mxu0 %v1060
    %1628 = vmatpush.msra.mxu0 %v1059
    %1629 = vmatpush.msra.mxu0 %v1058
    %1630 = vmatmul.f32.gmra.mxu0 %v876
    %v1631 = vpop.f32.mrf.mxu0
    %v1632 = vadd.f32 %v1612, %v1631
    %1633 = vdwg.mxu0
    %1634 = vmatpush.msra.mxu0 %v1089
    %1635 = vmatpush.msra.mxu0 %v1088
    %1636 = vmatpush.msra.mxu0 %v1087
    %1637 = vmatpush.msra.mxu0 %v1086
    %1638 = vmatpush.msra.mxu0 %v1085
    %1639 = vmatpush.msra.mxu0 %v1084
    %1640 = vmatpush.msra.mxu0 %v1083
    %1641 = vmatpush.msra.mxu0 %v1082
    %1642 = vmatpush.msra.mxu0 %v1081
    %1643 = vmatpush.msra.mxu0 %v1080
    %1644 = vmatpush.msra.mxu0 %v1079
    %1645 = vmatpush.msra.mxu0 %v1078
    %1646 = vmatpush.msra.mxu0 %v1077
    %1647 = vmatpush.msra.mxu0 %v1076
    %1648 = vmatpush.msra.mxu0 %v1075
    %1649 = vmatpush.msra.mxu0 %v1074
    %1650 = vmatmul.f32.gmra.mxu0 %v877
    %v1651 = vpop.f32.mrf.mxu0
    %v1652 = vadd.f32 %v1632, %v1651
    %1653 = vdwg.mxu0
    %1654 = vmatpush.msra.mxu0 %v1105
    %1655 = vmatpush.msra.mxu0 %v1104
    %1656 = vmatpush.msra.mxu0 %v1103
    %1657 = vmatpush.msra.mxu0 %v1102
    %1658 = vmatpush.msra.mxu0 %v1101
    %1659 = vmatpush.msra.mxu0 %v1100
    %1660 = vmatpush.msra.mxu0 %v1099
    %1661 = vmatpush.msra.mxu0 %v1098
    %1662 = vmatpush.msra.mxu0 %v1097
    %1663 = vmatpush.msra.mxu0 %v1096
    %1664 = vmatpush.msra.mxu0 %v1095
    %1665 = vmatpush.msra.mxu0 %v1094
    %1666 = vmatpush.msra.mxu0 %v1093
    %1667 = vmatpush.msra.mxu0 %v1092
    %1668 = vmatpush.msra.mxu0 %v1091
    %1669 = vmatpush.msra.mxu0 %v1090
    %1670 = vmatmul.f32.gmra.mxu0 %v878
    %v1671 = vpop.f32.mrf.mxu0
    %v1672 = vadd.f32 %v1652, %v1671
    %1673 = vdwg.mxu0
    %1674 = vmatpush.msra.mxu0 %v1121
    %1675 = vmatpush.msra.mxu0 %v1120
    %1676 = vmatpush.msra.mxu0 %v1119
    %1677 = vmatpush.msra.mxu0 %v1118
    %1678 = vmatpush.msra.mxu0 %v1117
    %1679 = vmatpush.msra.mxu0 %v1116
    %1680 = vmatpush.msra.mxu0 %v1115
    %1681 = vmatpush.msra.mxu0 %v1114
    %1682 = vmatpush.msra.mxu0 %v1113
    %1683 = vmatpush.msra.mxu0 %v1112
    %1684 = vmatpush.msra.mxu0 %v1111
    %1685 = vmatpush.msra.mxu0 %v1110
    %1686 = vmatpush.msra.mxu0 %v1109
    %1687 = vmatpush.msra.mxu0 %v1108
    %1688 = vmatpush.msra.mxu0 %v1107
    %1689 = vmatpush.msra.mxu0 %v1106
    %1690 = vmatmul.f32.gmra.mxu0 %v879
    %v1691 = vpop.f32.mrf.mxu0
    %v1692 = vadd.f32 %v1672, %v1691
    %1693 = vdwg.mxu0
    %1694 = vmatpush.msra.mxu0 %v1137
    %1695 = vmatpush.msra.mxu0 %v1136
    %1696 = vmatpush.msra.mxu0 %v1135
    %1697 = vmatpush.msra.mxu0 %v1134
    %1698 = vmatpush.msra.mxu0 %v1133
    %1699 = vmatpush.msra.mxu0 %v1132
    %1700 = vmatpush.msra.mxu0 %v1131
    %1701 = vmatpush.msra.mxu0 %v1130
    %1702 = vmatpush.msra.mxu0 %v1129
    %1703 = vmatpush.msra.mxu0 %v1128
    %1704 = vmatpush.msra.mxu0 %v1127
    %1705 = vmatpush.msra.mxu0 %v1126
    %1706 = vmatpush.msra.mxu0 %v1125
    %1707 = vmatpush.msra.mxu0 %v1124
    %1708 = vmatpush.msra.mxu0 %v1123
    %1709 = vmatpush.msra.mxu0 %v1122
    %1710 = vmatmul.f32.gmra.mxu0 %v880
    %v1711 = vpop.f32.mrf.mxu0
    %v1712 = vadd.f32 %v1692, %v1711
    %1713 = vdwg.mxu0
    %1714 = vmatpush.msra.mxu0 %v1153
    %1715 = vmatpush.msra.mxu0 %v1152
    %1716 = vmatpush.msra.mxu0 %v1151
    %1717 = vmatpush.msra.mxu0 %v1150
    %1718 = vmatpush.msra.mxu0 %v1149
    %1719 = vmatpush.msra.mxu0 %v1148
    %1720 = vmatpush.msra.mxu0 %v1147
    %1721 = vmatpush.msra.mxu0 %v1146
    %1722 = vmatpush.msra.mxu0 %v1145
    %1723 = vmatpush.msra.mxu0 %v1144
    %1724 = vmatpush.msra.mxu0 %v1143
    %1725 = vmatpush.msra.mxu0 %v1142
    %1726 = vmatpush.msra.mxu0 %v1141
    %1727 = vmatpush.msra.mxu0 %v1140
    %1728 = vmatpush.msra.mxu0 %v1139
    %1729 = vmatpush.msra.mxu0 %v1138
    %1730 = vmatmul.f32.gmra.mxu0 %v881
    %v1731 = vpop.f32.mrf.mxu0
    %v1732 = vadd.f32 %v1712, %v1731
    %1733 = vdwg.mxu0
    %1734 = vmatpush.msra.mxu0 %v1169
    %1735 = vmatpush.msra.mxu0 %v1168
    %1736 = vmatpush.msra.mxu0 %v1167
    %1737 = vmatpush.msra.mxu0 %v1166
    %1738 = vmatpush.msra.mxu0 %v1165
    %1739 = vmatpush.msra.mxu0 %v1164
    %1740 = vmatpush.msra.mxu0 %v1163
    %1741 = vmatpush.msra.mxu0 %v1162
    %1742 = vmatpush.msra.mxu0 %v1161
    %1743 = vmatpush.msra.mxu0 %v1160
    %1744 = vmatpush.msra.mxu0 %v1159
    %1745 = vmatpush.msra.mxu0 %v1158
    %1746 = vmatpush.msra.mxu0 %v1157
    %1747 = vmatpush.msra.mxu0 %v1156
    %1748 = vmatpush.msra.mxu0 %v1155
    %1749 = vmatpush.msra.mxu0 %v1154
    %1750 = vmatmul.f32.gmra.mxu0 %v882
    %v1751 = vpop.f32.mrf.mxu0
    %v1752 = vadd.f32 %v1732, %v1751
    %1753 = vdwg.mxu0
    %1754 = vmatpush.msra.mxu0 %v1185
    %1755 = vmatpush.msra.mxu0 %v1184
    %1756 = vmatpush.msra.mxu0 %v1183
    %1757 = vmatpush.msra.mxu0 %v1182
    %1758 = vmatpush.msra.mxu0 %v1181
    %1759 = vmatpush.msra.mxu0 %v1180
    %1760 = vmatpush.msra.mxu0 %v1179
    %1761 = vmatpush.msra.mxu0 %v1178
    %1762 = vmatpush.msra.mxu0 %v1177
    %1763 = vmatpush.msra.mxu0 %v1176
    %1764 = vmatpush.msra.mxu0 %v1175
    %1765 = vmatpush.msra.mxu0 %v1174
    %1766 = vmatpush.msra.mxu0 %v1173
    %1767 = vmatpush.msra.mxu0 %v1172
    %1768 = vmatpush.msra.mxu0 %v1171
    %1769 = vmatpush.msra.mxu0 %v1170
    %1770 = vmatmul.f32.gmra.mxu0 %v883
    %v1771 = vpop.f32.mrf.mxu0
    %v1772 = vadd.f32 %v1752, %v1771
    %1773 = vdwg.mxu0
    %1774 = vmatpush.msra.mxu0 %v1201
    %1775 = vmatpush.msra.mxu0 %v1200
    %1776 = vmatpush.msra.mxu0 %v1199
    %1777 = vmatpush.msra.mxu0 %v1198
    %1778 = vmatpush.msra.mxu0 %v1197
    %1779 = vmatpush.msra.mxu0 %v1196
    %1780 = vmatpush.msra.mxu0 %v1195
    %1781 = vmatpush.msra.mxu0 %v1194
    %1782 = vmatpush.msra.mxu0 %v1193
    %1783 = vmatpush.msra.mxu0 %v1192
    %1784 = vmatpush.msra.mxu0 %v1191
    %1785 = vmatpush.msra.mxu0 %v1190
    %1786 = vmatpush.msra.mxu0 %v1189
    %1787 = vmatpush.msra.mxu0 %v1188
    %1788 = vmatpush.msra.mxu0 %v1187
    %1789 = vmatpush.msra.mxu0 %v1186
    %1790 = vmatmul.f32.gmra.mxu0 %v884
    %v1791 = vpop.f32.mrf.mxu0
    %v1792 = vadd.f32 %v1772, %v1791
    %1793 = vdwg.mxu0
    %1794 = vmatpush.msra.mxu0 %v1217
    %1795 = vmatpush.msra.mxu0 %v1216
    %1796 = vmatpush.msra.mxu0 %v1215
    %1797 = vmatpush.msra.mxu0 %v1214
    %1798 = vmatpush.msra.mxu0 %v1213
    %1799 = vmatpush.msra.mxu0 %v1212
    %1800 = vmatpush.msra.mxu0 %v1211
    %1801 = vmatpush.msra.mxu0 %v1210
    %1802 = vmatpush.msra.mxu0 %v1209
    %1803 = vmatpush.msra.mxu0 %v1208
    %1804 = vmatpush.msra.mxu0 %v1207
    %1805 = vmatpush.msra.mxu0 %v1206
    %1806 = vmatpush.msra.mxu0 %v1205
    %1807 = vmatpush.msra.mxu0 %v1204
    %1808 = vmatpush.msra.mxu0 %v1203
    %1809 = vmatpush.msra.mxu0 %v1202
    %1810 = vmatmul.f32.gmra.mxu0 %v885
    %v1811 = vpop.f32.mrf.mxu0
    %v1812 = vadd.f32 %v1792, %v1811
    %1813 = vdwg.mxu0
    %1814 = vmatpush.msra.mxu0 %v1233
    %1815 = vmatpush.msra.mxu0 %v1232
    %1816 = vmatpush.msra.mxu0 %v1231
    %1817 = vmatpush.msra.mxu0 %v1230
    %1818 = vmatpush.msra.mxu0 %v1229
    %1819 = vmatpush.msra.mxu0 %v1228
    %1820 = vmatpush.msra.mxu0 %v1227
    %1821 = vmatpush.msra.mxu0 %v1226
    %1822 = vmatpush.msra.mxu0 %v1225
    %1823 = vmatpush.msra.mxu0 %v1224
    %1824 = vmatpush.msra.mxu0 %v1223
    %1825 = vmatpush.msra.mxu0 %v1222
    %1826 = vmatpush.msra.mxu0 %v1221
    %1827 = vmatpush.msra.mxu0 %v1220
    %1828 = vmatpush.msra.mxu0 %v1219
    %1829 = vmatpush.msra.mxu0 %v1218
    %1830 = vmatmul.f32.gmra.mxu0 %v886
    %v1831 = vpop.f32.mrf.mxu0
    %v1832 = vadd.f32 %v1812, %v1831
    %1833 = vdwg.mxu0
    %1834 = vmatpush.msra.mxu0 %v1249
    %1835 = vmatpush.msra.mxu0 %v1248
    %1836 = vmatpush.msra.mxu0 %v1247
    %1837 = vmatpush.msra.mxu0 %v1246
    %1838 = vmatpush.msra.mxu0 %v1245
    %1839 = vmatpush.msra.mxu0 %v1244
    %1840 = vmatpush.msra.mxu0 %v1243
    %1841 = vmatpush.msra.mxu0 %v1242
    %1842 = vmatpush.msra.mxu0 %v1241
    %1843 = vmatpush.msra.mxu0 %v1240
    %1844 = vmatpush.msra.mxu0 %v1239
    %1845 = vmatpush.msra.mxu0 %v1238
    %1846 = vmatpush.msra.mxu0 %v1237
    %1847 = vmatpush.msra.mxu0 %v1236
    %1848 = vmatpush.msra.mxu0 %v1235
    %1849 = vmatpush.msra.mxu0 %v1234
    %1850 = vmatmul.f32.gmra.mxu0 %v887
    %v1851 = vpop.f32.mrf.mxu0
    %v1852 = vadd.f32 %v1832, %v1851
    %1853 = vdwg.mxu0
    %1854 = vmatpush.msra.mxu0 %v1265
    %1855 = vmatpush.msra.mxu0 %v1264
    %1856 = vmatpush.msra.mxu0 %v1263
    %1857 = vmatpush.msra.mxu0 %v1262
    %1858 = vmatpush.msra.mxu0 %v1261
    %1859 = vmatpush.msra.mxu0 %v1260
    %1860 = vmatpush.msra.mxu0 %v1259
    %1861 = vmatpush.msra.mxu0 %v1258
    %1862 = vmatpush.msra.mxu0 %v1257
    %1863 = vmatpush.msra.mxu0 %v1256
    %1864 = vmatpush.msra.mxu0 %v1255
    %1865 = vmatpush.msra.mxu0 %v1254
    %1866 = vmatpush.msra.mxu0 %v1253
    %1867 = vmatpush.msra.mxu0 %v1252
    %1868 = vmatpush.msra.mxu0 %v1251
    %1869 = vmatpush.msra.mxu0 %v1250
    %1870 = vmatmul.f32.gmra.mxu0 %v888
    %v1871 = vpop.f32.mrf.mxu0
    %v1872 = vadd.f32 %v1852, %v1871
    %1873 = vdwg.mxu0
    %1874 = vmatpush.msra.mxu0 %v1281
    %1875 = vmatpush.msra.mxu0 %v1280
    %1876 = vmatpush.msra.mxu0 %v1279
    %1877 = vmatpush.msra.mxu0 %v1278
    %1878 = vmatpush.msra.mxu0 %v1277
    %1879 = vmatpush.msra.mxu0 %v1276
    %1880 = vmatpush.msra.mxu0 %v1275
    %1881 = vmatpush.msra.mxu0 %v1274
    %1882 = vmatpush.msra.mxu0 %v1273
    %1883 = vmatpush.msra.mxu0 %v1272
    %1884 = vmatpush.msra.mxu0 %v1271
    %1885 = vmatpush.msra.mxu0 %v1270
    %1886 = vmatpush.msra.mxu0 %v1269
    %1887 = vmatpush.msra.mxu0 %v1268
    %1888 = vmatpush.msra.mxu0 %v1267
    %1889 = vmatpush.msra.mxu0 %v1266
    %1890 = vmatmul.f32.gmra.mxu0 %v889
    %v1891 = vpop.f32.mrf.mxu0
    %v1892 = vadd.f32 %v1872, %v1891
    %1893 = vdwg.mxu0
    %1894 = vmatpush.msra.mxu0 %v1297
    %1895 = vmatpush.msra.mxu0 %v1296
    %1896 = vmatpush.msra.mxu0 %v1295
    %1897 = vmatpush.msra.mxu0 %v1294
    %1898 = vmatpush.msra.mxu0 %v1293
    %1899 = vmatpush.msra.mxu0 %v1292
    %1900 = vmatpush.msra.mxu0 %v1291
    %1901 = vmatpush.msra.mxu0 %v1290
    %1902 = vmatpush.msra.mxu0 %v1289
    %1903 = vmatpush.msra.mxu0 %v1288
    %1904 = vmatpush.msra.mxu0 %v1287
    %1905 = vmatpush.msra.mxu0 %v1286
    %1906 = vmatpush.msra.mxu0 %v1285
    %1907 = vmatpush.msra.mxu0 %v1284
    %1908 = vmatpush.msra.mxu0 %v1283
    %1909 = vmatpush.msra.mxu0 %v1282
    %1910 = vmatmul.f32.gmra.mxu0 %v890
    %v1911 = vpop.f32.mrf.mxu0
    %v1912 = vadd.f32 %v1892, %v1911
    %1913 = vdwg.mxu0
    %1914 = vmatpush.msra.mxu0 %v1313
    %1915 = vmatpush.msra.mxu0 %v1312
    %1916 = vmatpush.msra.mxu0 %v1311
    %1917 = vmatpush.msra.mxu0 %v1310
    %1918 = vmatpush.msra.mxu0 %v1309
    %1919 = vmatpush.msra.mxu0 %v1308
    %1920 = vmatpush.msra.mxu0 %v1307
    %1921 = vmatpush.msra.mxu0 %v1306
    %1922 = vmatpush.msra.mxu0 %v1305
    %1923 = vmatpush.msra.mxu0 %v1304
    %1924 = vmatpush.msra.mxu0 %v1303
    %1925 = vmatpush.msra.mxu0 %v1302
    %1926 = vmatpush.msra.mxu0 %v1301
    %1927 = vmatpush.msra.mxu0 %v1300
    %1928 = vmatpush.msra.mxu0 %v1299
    %1929 = vmatpush.msra.mxu0 %v1298
    %1930 = vmatmul.f32.gmra.mxu0 %v891
    %v1931 = vpop.f32.mrf.mxu0
    %v1932 = vadd.f32 %v1912, %v1931
    %1933 = vdwg.mxu0
    %1934 = vmatpush.msra.mxu0 %v1329
    %1935 = vmatpush.msra.mxu0 %v1328
    %1936 = vmatpush.msra.mxu0 %v1327
    %1937 = vmatpush.msra.mxu0 %v1326
    %1938 = vmatpush.msra.mxu0 %v1325
    %1939 = vmatpush.msra.mxu0 %v1324
    %1940 = vmatpush.msra.mxu0 %v1323
    %1941 = vmatpush.msra.mxu0 %v1322
    %1942 = vmatpush.msra.mxu0 %v1321
    %1943 = vmatpush.msra.mxu0 %v1320
    %1944 = vmatpush.msra.mxu0 %v1319
    %1945 = vmatpush.msra.mxu0 %v1318
    %1946 = vmatpush.msra.mxu0 %v1317
    %1947 = vmatpush.msra.mxu0 %v1316
    %1948 = vmatpush.msra.mxu0 %v1315
    %1949 = vmatpush.msra.mxu0 %v1314
    %1950 = vmatmul.f32.gmra.mxu0 %v892
    %v1951 = vpop.f32.mrf.mxu0
    %v1952 = vadd.f32 %v1932, %v1951
    %1953 = vdwg.mxu0
    %1954 = vmatpush.msra.mxu0 %v1345
    %1955 = vmatpush.msra.mxu0 %v1344
    %1956 = vmatpush.msra.mxu0 %v1343
    %1957 = vmatpush.msra.mxu0 %v1342
    %1958 = vmatpush.msra.mxu0 %v1341
    %1959 = vmatpush.msra.mxu0 %v1340
    %1960 = vmatpush.msra.mxu0 %v1339
    %1961 = vmatpush.msra.mxu0 %v1338
    %1962 = vmatpush.msra.mxu0 %v1337
    %1963 = vmatpush.msra.mxu0 %v1336
    %1964 = vmatpush.msra.mxu0 %v1335
    %1965 = vmatpush.msra.mxu0 %v1334
    %1966 = vmatpush.msra.mxu0 %v1333
    %1967 = vmatpush.msra.mxu0 %v1332
    %1968 = vmatpush.msra.mxu0 %v1331
    %1969 = vmatpush.msra.mxu0 %v1330
    %1970 = vmatmul.f32.gmra.mxu0 %v893
    %v1971 = vpop.f32.mrf.mxu0
    %v1972 = vadd.f32 %v1952, %v1971
    %1973 = vdwg.mxu0
    %1974 = vmatpush.msra.mxu0 %v1361
    %1975 = vmatpush.msra.mxu0 %v1360
    %1976 = vmatpush.msra.mxu0 %v1359
    %1977 = vmatpush.msra.mxu0 %v1358
    %1978 = vmatpush.msra.mxu0 %v1357
    %1979 = vmatpush.msra.mxu0 %v1356
    %1980 = vmatpush.msra.mxu0 %v1355
    %1981 = vmatpush.msra.mxu0 %v1354
    %1982 = vmatpush.msra.mxu0 %v1353
    %1983 = vmatpush.msra.mxu0 %v1352
    %1984 = vmatpush.msra.mxu0 %v1351
    %1985 = vmatpush.msra.mxu0 %v1350
    %1986 = vmatpush.msra.mxu0 %v1349
    %1987 = vmatpush.msra.mxu0 %v1348
    %1988 = vmatpush.msra.mxu0 %v1347
    %1989 = vmatpush.msra.mxu0 %v1346
    %1990 = vmatmul.f32.gmra.mxu0 %v894
    %v1991 = vpop.f32.mrf.mxu0
    %v1992 = vadd.f32 %v1972, %v1991
    %1993 = vdwg.mxu0
    %1994 = vmatpush.msra.mxu0 %v1377
    %1995 = vmatpush.msra.mxu0 %v1376
    %1996 = vmatpush.msra.mxu0 %v1375
    %1997 = vmatpush.msra.mxu0 %v1374
    %1998 = vmatpush.msra.mxu0 %v1373
    %1999 = vmatpush.msra.mxu0 %v1372
    %2000 = vmatpush.msra.mxu0 %v1371
    %2001 = vmatpush.msra.mxu0 %v1370
    %2002 = vmatpush.msra.mxu0 %v1369
    %2003 = vmatpush.msra.mxu0 %v1368
    %2004 = vmatpush.msra.mxu0 %v1367
    %2005 = vmatpush.msra.mxu0 %v1366
    %2006 = vmatpush.msra.mxu0 %v1365
    %2007 = vmatpush.msra.mxu0 %v1364
    %2008 = vmatpush.msra.mxu0 %v1363
    %2009 = vmatpush.msra.mxu0 %v1362
    %2010 = vmatmul.f32.gmra.mxu0 %v895
    %v2011 = vpop.f32.mrf.mxu0
    %v2012 = vadd.f32 %v1992, %v2011
    %2013 = vdwg.mxu0
    %2014 = vmatpush.msra.mxu0 %v1393
    %2015 = vmatpush.msra.mxu0 %v1392
    %2016 = vmatpush.msra.mxu0 %v1391
    %2017 = vmatpush.msra.mxu0 %v1390
    %2018 = vmatpush.msra.mxu0 %v1389
    %2019 = vmatpush.msra.mxu0 %v1388
    %2020 = vmatpush.msra.mxu0 %v1387
    %2021 = vmatpush.msra.mxu0 %v1386
    %2022 = vmatpush.msra.mxu0 %v1385
    %2023 = vmatpush.msra.mxu0 %v1384
    %2024 = vmatpush.msra.mxu0 %v1383
    %2025 = vmatpush.msra.mxu0 %v1382
    %2026 = vmatpush.msra.mxu0 %v1381
    %2027 = vmatpush.msra.mxu0 %v1380
    %2028 = vmatpush.msra.mxu0 %v1379
    %2029 = vmatpush.msra.mxu0 %v1378
    %2030 = vmatmul.f32.gmra.mxu0 %v896
    %v2031 = vpop.f32.mrf.mxu0
    %v2032 = vadd.f32 %v2012, %v2031
    %2033 = vdwg.mxu0
    %2034 = vmatpush.msra.mxu0 %v1409
    %2035 = vmatpush.msra.mxu0 %v1408
    %2036 = vmatpush.msra.mxu0 %v1407
    %2037 = vmatpush.msra.mxu0 %v1406
    %2038 = vmatpush.msra.mxu0 %v1405
    %2039 = vmatpush.msra.mxu0 %v1404
    %2040 = vmatpush.msra.mxu0 %v1403
    %2041 = vmatpush.msra.mxu0 %v1402
    %2042 = vmatpush.msra.mxu0 %v1401
    %2043 = vmatpush.msra.mxu0 %v1400
    %2044 = vmatpush.msra.mxu0 %v1399
    %2045 = vmatpush.msra.mxu0 %v1398
    %2046 = vmatpush.msra.mxu0 %v1397
    %2047 = vmatpush.msra.mxu0 %v1396
    %2048 = vmatpush.msra.mxu0 %v1395
    %2049 = vmatpush.msra.mxu0 %v1394
    %2050 = vmatmul.f32.gmra.mxu0 %v897
    %v2051 = vpop.f32.mrf.mxu0
    %v2052 = vadd.f32 %v2032, %v2051
    %2053 = vdwg.mxu0
    %vm2054 = vcmask 130048
    %v2055 = vsel %vm2054, %v2052, -inf
    %2056 = vmax.xlane.f32.xlu0 %v2055
    %v2057 = vpop.xlane.xlu0 %2056
    %v2058 = vsub.f32 %v2052, %v2057
    %v2059 = vmul.f32 %v2058, 1.442695
    %v2060 = vpow.pop %v2059
    %v2061 = vsel %vm2054, %v2060, 0.0
    %2062 = vadd.xlane.f32.xlu0 %v2061
    %v2063 = vpop.xlane.xlu0 %2062
    %v2064 = vlog2.pop %v2063
    %v2065 = vmul.f32 %v2064, 0.6931472
    %v2066 = vsub.f32 %v2058, %v2065
    %2067 = vst.msk [vmem:[#allocation2] sm:$0xff] %vm2054, %v2066
    // Predicated region
    $region22: #{tpu_custom_call.1} parent=1 // pred_check
      _
    $region23: #{tpu_custom_call.1} parent=1 // pred_check_branch
      %2069 = sbr.rel (0) target = $region25
    $region24: #{tpu_custom_call.1} parent=1 // pred_region
      %2071 = vsyncadd [#allocation3], 0
      %s2073 = sshll.u32 [#allocation2], 4
      %s2074 = int_to_ptr.vmem [resolvable:$true] %s2073
      %s2075 = sshll.u32 %s5, 4
      %s2076 = int_to_ptr.hbm [resolvable:$true] %s2075
      %2078 = dma.vmem_to_hbm [thread:$0]  %s2074, 128, %s2076, [#allocation3]
    $region25: #{tpu_custom_call.1} parent=1 // pred_fallthru
      _
    // Predicated region
    $region26: #{tpu_custom_call.1} parent=1 // pred_check
      _
    $region27: #{tpu_custom_call.1} parent=1 // pred_check_branch
      %2080 = sbr.rel (0) target = $region29
    $region28: #{tpu_custom_call.1} parent=1 // pred_region
      %2082 = dma.done [#allocation3], 128
    $region29: #{tpu_custom_call.1} parent=1 // pred_fallthru
      _
    %2083 = vsyncpa [#allocation3], 1

</llo_original>
